<compile_context>
chip_gen: v7x
topology: tpu7x:2x2x1
jax: 0.10.0
libtpu: 0.0.40
codegen_flags: <defaults>
</compile_context>

<pallas_src>
import jax
import jax.numpy as jnp
from jax.experimental import pallas as pl
from jax.experimental.pallas import tpu as pltpu


# ----------------------------------------------------------------------------
# Kernel
# ----------------------------------------------------------------------------
def _make_kernel(layers: int, nf: int, c_out: int):
    """Fused residual-block kernel for a static number of dense layers.

    Packed parameter layout (all slices below are static / tile-aligned):
      w0  : (C_in, c_out + nf)  bf16   [shortcut | conv1_0 * s2_0]
      wnf : (R_nf, nf)          bf16   rows: w2_0*s3_0 (nf) , then per layer
                                       l>=1: w1_l*s2_l (c_out) , w2_l*s3_l (nf)
      wco : (layers*nf, c_out)  bf16   rows: w3_0, w3_1, ...
      anf : (2*layers, nf)      f32    rows 2l: b2_l ; 2l+1: b3_l
      aco : (2*layers, c_out)   f32    rows 2(l-1)/+1: pre_s_l/pre_b_l (l>=1);
                                       rows 2(layers-1)/+1: final fs/fb
    """

    def kernel(x_ref, w0_ref, wnf_ref, wco_ref, anf_ref, aco_ref, o_ref):
        cdt = w0_ref.dtype                       # compute/stream dtype (bf16)
        x = x_ref[...].astype(cdt)               # in-kernel cast (no XLA pass)

        # Fused shortcut + layer-0 conv1: one MXU pass, slice at lane 128.
        y = jnp.dot(x, w0_ref[...], preferred_element_type=jnp.float32)
        sc = y[:, :c_out]                                     # shortcut (f32)
        h = jnp.maximum(y[:, c_out:] + anf_ref[0:1, :], 0.0)  # conv1+norm2+relu2
        h = jnp.dot(h.astype(cdt), wnf_ref[0:nf, :],
                    preferred_element_type=jnp.float32)       # conv2 (1x1, +s3)
        h = jnp.maximum(h + anf_ref[1:2, :], 0.0)             # norm3+relu3
        h = jnp.dot(h.astype(cdt), wco_ref[0:nf, :],
                    preferred_element_type=jnp.float32)       # conv3
        h = h + sc
        sc = h

        off = nf
        for l in range(1, layers):
            pb = 2 * (l - 1)
            # preact norm + relu (pre_s can't fold into w1: ReLU in between)
            g = jnp.maximum(h * aco_ref[pb:pb + 1, :] + aco_ref[pb + 1:pb + 2, :],
                            0.0)
            g = jnp.dot(g.astype(cdt), wnf_ref[off:off + c_out, :],
                        preferred_element_type=jnp.float32)   # conv1 (+s2)
            off += c_out
            g = jnp.maximum(g + anf_ref[2 * l:2 * l + 1, :], 0.0)
            g = jnp.dot(g.astype(cdt), wnf_ref[off:off + nf, :],
                        preferred_element_type=jnp.float32)   # conv2 (+s3)
            off += nf
            g = jnp.maximum(g + anf_ref[2 * l + 1:2 * l + 2, :], 0.0)
            g = jnp.dot(g.astype(cdt), wco_ref[l * nf:(l + 1) * nf, :],
                        preferred_element_type=jnp.float32)   # conv3
            h = g + sc
            sc = h

        # bna_block: NOT folded into w3 (it must also scale the residual sc).
        fo = 2 * (layers - 1)
        fs = aco_ref[fo:fo + 1, :]
        fb = aco_ref[fo + 1:fo + 2, :]
        o_ref[...] = jnp.maximum(h * fs + fb, 0.0).astype(o_ref.dtype)

    return kernel


# ----------------------------------------------------------------------------
# Wrappers
# ----------------------------------------------------------------------------
def _residual_block_2d(x2d, packed, layers, nf, c_out, *, tm=2048,
                       out_dtype=None, vmem_limit_bytes=48 * 1024 * 1024):
    """x2d: (M, C_in) in its native dtype.  Returns (M, c_out) in out_dtype."""
    M, C_in = x2d.shape
    assert tm % 8 == 0, "tm must be a multiple of 8 (sublane tile)"
    out_dtype = x2d.dtype if out_dtype is None else out_dtype
    grid_m = pl.cdiv(M, tm)                # partial last block is masked by Pallas

    w0, wnf, wco, anf, aco = packed

    in_specs = [
        pl.BlockSpec((tm, C_in), lambda i: (i, 0)),
        pl.BlockSpec(w0.shape, lambda i: (0, 0)),
        pl.BlockSpec(wnf.shape, lambda i: (0, 0)),
        pl.BlockSpec(wco.shape, lambda i: (0, 0)),
        pl.BlockSpec(anf.shape, lambda i: (0, 0)),
        pl.BlockSpec(aco.shape, lambda i: (0, 0)),
    ]
    out_spec = pl.BlockSpec((tm, c_out), lambda i: (i, 0))

    # Advisory cost estimate for the XLA scheduler.
    flops_per_row = 2 * (C_in * (c_out + nf) + nf * nf + nf * c_out
                         + (layers - 1) * (c_out * nf + nf * nf + nf * c_out))
    param_bytes = sum(int(p.size) * jnp.dtype(p.dtype).itemsize for p in packed)
    bytes_accessed = (int(M) * C_in * jnp.dtype(x2d.dtype).itemsize
                      + int(M) * c_out * jnp.dtype(out_dtype).itemsize
                      + param_bytes)

    return pl.pallas_call(
        _make_kernel(layers, nf, c_out),
        out_shape=jax.ShapeDtypeStruct((M, c_out), out_dtype),
        grid_spec=pltpu.PrefetchScalarGridSpec(
            num_scalar_prefetch=0,
            grid=(grid_m,),
            in_specs=in_specs,
            out_specs=out_spec,
        ),
        compiler_params=pltpu.CompilerParams(
            dimension_semantics=("parallel",),
            vmem_limit_bytes=vmem_limit_bytes,
        ),
        cost_estimate=pl.CostEstimate(
            flops=int(M) * flops_per_row,
            transcendentals=0,
            bytes_accessed=int(bytes_accessed),
        ),
    )(x2d, w0, wnf, wco, anf, aco)


def residual_block_pallas_nhwc(x_nhwc, packed, layers, nf, c_out, *,
                               tm=2048, out_dtype=None):
    """Preferred entry point: channels-last (NHWC) in / out, no layout passes.

    Input stays in its native dtype (the f32->bf16 cast happens inside the
    kernel); output is emitted directly in out_dtype (default: input dtype)."""
    N, H, W, C_in = x_nhwc.shape
    x2d = x_nhwc.reshape(N * H * W, C_in)
    out2d = _residual_block_2d(x2d, packed, layers, nf, c_out, tm=tm,
                               out_dtype=out_dtype)
    return out2d.reshape(N, H, W, c_out)


def residual_block_pallas_nchw(x_nchw, packed, layers, nf, c_out, **kw):
    """Drop-in (NCHW) parity wrapper.  NOTE: the two transposes cost a full
    extra HBM pass each; keep the surrounding network channels-last instead."""
    x_nhwc = jnp.transpose(x_nchw, (0, 2, 3, 1))
    out = residual_block_pallas_nhwc(x_nhwc, packed, layers, nf, c_out, **kw)
    return jnp.transpose(out, (0, 3, 1, 2))


# ----------------------------------------------------------------------------
# Deterministic parameter construction (synthetic init, no checkpoints)
# ----------------------------------------------------------------------------
def build_raw_params(key, layers, c_in, nf, c_out):
    """Raw module-style params: conv weights as (cin, cout), BN as 4-tuples."""
    def conv(k, cin, cout):
        return 0.1 * jax.random.normal(k, (cin, cout), jnp.float32)

    def bn(k, c):
        k1, k2, k3, k4 = jax.random.split(k, 4)
        gamma = 1.0 + 0.1 * jax.random.normal(k1, (c,), jnp.float32)
        beta = 0.1 * jax.random.normal(k2, (c,), jnp.float32)
        mean = 0.1 * jax.random.normal(k3, (c,), jnp.float32)
        var = jnp.abs(jax.random.normal(k4, (c,), jnp.float32)) + 0.5
        return (gamma, beta, mean, var)

    keys = iter(jax.random.split(key, 2 + 6 * layers))
    raw = {"shortcut": conv(next(keys), c_in, c_out), "layers": []}
    for l in range(layers):
        lin = c_in if l == 0 else c_out
        lp = {}
        if l > 0:
            lp["pre"] = bn(next(keys), lin)     # preact_norm
        lp["w1"] = conv(next(keys), lin, nf)    # conv1 (1x1)
        lp["n2"] = bn(next(keys), nf)           # norm2
        lp["w2"] = conv(next(keys), nf, nf)     # conv2 (1x1 path)
        lp["n3"] = bn(next(keys), nf)           # norm3
        lp["w3"] = conv(next(keys), nf, c_out)  # conv3
        raw["layers"].append(lp)
    raw["final"] = bn(next(keys), c_out)        # bna_block norm
    return raw


def _bn_affine(p, eps=1e-5):
    gamma, beta, mean, var = p
    s = gamma / jnp.sqrt(var + eps)
    return s, beta - mean * s


def fold_params(raw, layers, nf, c_out, weight_dtype=jnp.bfloat16):
    """Build the 5 packed kernel params: BN scales folded (in f32) into the
    preceding conv weights (s2 -> w1 cols, s3 -> w2 cols), shortcut fused with
    layer-0 conv1, weights stacked into two slabs, affines into two slabs."""
    lp0 = raw["layers"][0]
    s2, b2 = _bn_affine(lp0["n2"])
    s3, b3 = _bn_affine(lp0["n3"])

    w0 = jnp.concatenate([raw["shortcut"], lp0["w1"] * s2[None, :]], axis=1)

    wnf_rows = [lp0["w2"] * s3[None, :]]                # (nf, nf)
    wco_rows = [lp0["w3"]]                              # (nf, c_out)
    anf_rows = [b2, b3]
    aco_rows = []

    for l in range(1, layers):
        lp = raw["layers"][l]
        ps, pb = _bn_affine(lp["pre"])                  # kept (ReLU follows)
        s2, b2 = _bn_affine(lp["n2"])
        s3, b3 = _bn_affine(lp["n3"])
        aco_rows += [ps, pb]
        wnf_rows += [lp["w1"] * s2[None, :], lp["w2"] * s3[None, :]]
        anf_rows += [b2, b3]
        wco_rows += [lp["w3"]]

    fs, fb = _bn_affine(raw["final"])                   # NOT folded into w3
    aco_rows += [fs, fb]

    return (
        w0.astype(weight_dtype),                                    # (C_in, c_out+nf)
        jnp.concatenate(wnf_rows, axis=0).astype(weight_dtype),     # (R_nf, nf)
        jnp.concatenate(wco_rows, axis=0).astype(weight_dtype),     # (layers*nf, c_out)
        jnp.stack(anf_rows, axis=0).astype(jnp.float32),            # (2*layers, nf)
        jnp.stack(aco_rows, axis=0).astype(jnp.float32),            # (2*layers, c_out)
    )


# ----------------------------------------------------------------------------
# Pure-JAX references (for verification)
# ----------------------------------------------------------------------------
def kernel_math_2d(x2d, packed, layers, nf, c_out):
    """Mirror of the kernel math on the packed params (any weight dtype)."""
    w0, wnf, wco, anf, aco = packed
    cdt = w0.dtype
    y = jnp.dot(x2d.astype(cdt), w0, preferred_element_type=jnp.float32)
    sc = y[:, :c_out]
    h = jnp.maximum(y[:, c_out:] + anf[0:1, :], 0.0)
    h = jnp.dot(h.astype(cdt), wnf[0:nf, :], preferred_element_type=jnp.float32)
    h = jnp.maximum(h + anf[1:2, :], 0.0)
    h = jnp.dot(h.astype(cdt), wco[0:nf, :], preferred_element_type=jnp.float32)
    h = h + sc
    sc = h
    off = nf
    for l in range(1, layers):
        pb = 2 * (l - 1)
        g = jnp.maximum(h * aco[pb:pb + 1, :] + aco[pb + 1:pb + 2, :], 0.0)
        g = jnp.dot(g.astype(cdt), wnf[off:off + c_out, :],
                    preferred_element_type=jnp.float32)
        off += c_out
        g = jnp.maximum(g + anf[2 * l:2 * l + 1, :], 0.0)
        g = jnp.dot(g.astype(cdt), wnf[off:off + nf, :],
                    preferred_element_type=jnp.float32)
        off += nf
        g = jnp.maximum(g + anf[2 * l + 1:2 * l + 2, :], 0.0)
        g = jnp.dot(g.astype(cdt), wco[l * nf:(l + 1) * nf, :],
                    preferred_element_type=jnp.float32)
        h = g + sc
        sc = h
    fo = 2 * (layers - 1)
    return jnp.maximum(h * aco[fo:fo + 1, :] + aco[fo + 1:fo + 2, :], 0.0)


def module_ref_2d(x2d, raw, layers, eps=1e-5):
    """Module-style f32 reference with unfolded batch norms."""
    def bn(x, p):
        gamma, beta, mean, var = p
        return (x - mean) * (gamma / jnp.sqrt(var + eps)) + beta

    sc = x2d @ raw["shortcut"]
    h = x2d
    for l in range(layers):
        lp = raw["layers"][l]
        if l > 0:
            h = jnp.maximum(bn(h, lp["pre"]), 0.0)
        h = jnp.maximum(bn(h @ lp["w1"], lp["n2"]), 0.0)
        h = jnp.maximum(bn(h @ lp["w2"], lp["n3"]), 0.0)
        h = h @ lp["w3"]
        h = h + sc
        sc = h
    return jnp.maximum(bn(h, raw["final"]), 0.0)


# ----------------------------------------------------------------------------
if __name__ == "__main__":
    key = jax.random.PRNGKey(0)
    kx, kp = jax.random.split(key)

    # in_channels must be 64 for the stride-1 shortcut branch of _ResidualBlock.
    # M = N*H*W = 2048 pixels -> grid_m = 8 at tm=256, i.e. 4 pipelined steps
    # per TensorCore on v7x (DMA/compute overlap even at this small demo size).
    N, C_in, H, W = 2, 64, 32, 32
    layers, num_features, C_out = 2, 32, 128
    tm = 256            # demo tile; production default is tm=2048

    raw = build_raw_params(kp, layers, C_in, num_features, C_out)
    packed_bf16 = fold_params(raw, layers, num_features, C_out,
                              weight_dtype=jnp.bfloat16)
    packed_f32 = fold_params(raw, layers, num_features, C_out,
                             weight_dtype=jnp.float32)

    # The PyTorch module is NCHW; the TPU-preferred layout is NHWC. The one-time
    # layout conversion happens here at the network boundary, not per-block.
    x_nchw = jax.random.normal(kx, (N, C_in, H, W), jnp.float32)
    x_nhwc = jnp.transpose(x_nchw, (0, 2, 3, 1))

    out_nhwc = residual_block_pallas_nhwc(x_nhwc, packed_bf16, layers,
                                          num_features, C_out, tm=tm)
    out_nhwc = jax.block_until_ready(out_nhwc)
    assert out_nhwc.shape == (N, H, W, C_out)
    assert out_nhwc.dtype == x_nhwc.dtype          # f32 out -> no later cast pass
    out_nchw = jnp.transpose(out_nhwc, (0, 3, 1, 2))   # module-parity layout
    assert out_nchw.shape == (N, C_out, H, W)

    x2d = x_nhwc.reshape(-1, C_in)

    # Check 1: Pallas kernel vs pure-JAX mirror on the SAME packed bf16 params.
    mirror = kernel_math_2d(x2d, packed_bf16, layers, num_features, C_out)
    a = out_nhwc.reshape(-1, C_out).astype(jnp.float32)
    b = mirror.astype(jnp.float32)
    err1 = float(jnp.max(jnp.abs(a - b)))
    scale1 = float(jnp.max(jnp.abs(b))) + 1.0
    if err1 > 1e-2 * scale1:
        raise RuntimeError(f"kernel vs bf16 mirror mismatch, max abs err = {err1}")

    # Check 2: folded/packed f32 math vs unfolded module-style f32 reference
    # (validates the BN folding / shortcut fusion / packing algebra).
    folded = kernel_math_2d(x2d, packed_f32, layers, num_features, C_out)
    ref = module_ref_2d(x2d, raw, layers)
    err2 = float(jnp.max(jnp.abs(folded - ref)))
    scale2 = float(jnp.max(jnp.abs(ref))) + 1.0
    if err2 > 1e-4 * scale2:
        raise RuntimeError(f"folded vs module reference mismatch, max abs err = {err2}")

    print("KERNEL_OK")
</pallas_src>

<mosaic_0001>
module attributes {stable_mosaic.version = 11 : i64} {
  func.func @kernel(%arg0: i32, %arg1: memref<256x64xf32, #tpu.memory_space<vmem>>, %arg2: memref<64x160xbf16, #tpu.memory_space<vmem>>, %arg3: memref<192x32xbf16, #tpu.memory_space<vmem>>, %arg4: memref<64x128xbf16, #tpu.memory_space<vmem>>, %arg5: memref<4x32xf32, #tpu.memory_space<vmem>>, %arg6: memref<4x128xf32, #tpu.memory_space<vmem>>, %arg7: memref<256x128xf32, #tpu.memory_space<vmem>>) attributes {dimension_semantics = [#tpu.dimension_semantics<parallel>], iteration_bounds = array<i64: 8>, scalar_prefetch = 0 : i64, scratch_operands = 0 : i64, tpu.core_type = #tpu.core_type<tc>, window_params = [{transform_indices = @transform_0, window_bounds = array<i64: 256, 64>}, {pipeline_mode = #tpu.pipeline_mode<synchronous>, transform_indices = @transform_1, window_bounds = array<i64: 64, 160>}, {pipeline_mode = #tpu.pipeline_mode<synchronous>, transform_indices = @transform_2, window_bounds = array<i64: 192, 32>}, {pipeline_mode = #tpu.pipeline_mode<synchronous>, transform_indices = @transform_3, window_bounds = array<i64: 64, 128>}, {pipeline_mode = #tpu.pipeline_mode<synchronous>, transform_indices = @transform_4, window_bounds = array<i64: 4, 32>}, {pipeline_mode = #tpu.pipeline_mode<synchronous>, transform_indices = @transform_5, window_bounds = array<i64: 4, 128>}, {transform_indices = @transform_6, window_bounds = array<i64: 256, 128>}]} {
    %c0 = arith.constant 0 : index
    %c0_0 = arith.constant 0 : index
    %0 = vector.load %arg1[%c0, %c0_0] : memref<256x64xf32, #tpu.memory_space<vmem>>, vector<256x64xf32>
    %1 = arith.truncf %0 : vector<256x64xf32> to vector<256x64xbf16>
    %c0_1 = arith.constant 0 : index
    %c0_2 = arith.constant 0 : index
    %2 = vector.load %arg2[%c0_1, %c0_2] : memref<64x160xbf16, #tpu.memory_space<vmem>>, vector<64x160xbf16>
    %cst = arith.constant dense<0.000000e+00> : vector<256x160xf32>
    %3 = tpu.matmul %1, %2, %cst {dimension_numbers = #tpu.dot_dimension_numbers<[1], [0], [0], [1], [0, 0, 1, 1], [], []>} : vector<256x64xbf16>, vector<64x160xbf16>, vector<256x160xf32> -> vector<256x160xf32>
    %4 = vector.extract_strided_slice %3 {offsets = [0, 0], sizes = [256, 128], strides = [1, 1]} : vector<256x160xf32> to vector<256x128xf32>
    %5 = vector.extract_strided_slice %3 {offsets = [0, 128], sizes = [256, 32], strides = [1, 1]} : vector<256x160xf32> to vector<256x32xf32>
    %c0_3 = arith.constant 0 : index
    %c0_4 = arith.constant 0 : index
    %6 = vector.load %arg5[%c0_3, %c0_4] : memref<4x32xf32, #tpu.memory_space<vmem>>, vector<1x32xf32>
    %7 = vector.broadcast %6 : vector<1x32xf32> to vector<256x32xf32>
    %8 = arith.addf %5, %7 : vector<256x32xf32>
    %cst_5 = arith.constant 0.000000e+00 : f32
    %9 = vector.broadcast %cst_5 : f32 to vector<256x32xf32>
    %10 = arith.maximumf %8, %9 : vector<256x32xf32>
    %11 = arith.truncf %10 : vector<256x32xf32> to vector<256x32xbf16>
    %c0_6 = arith.constant 0 : index
    %c0_7 = arith.constant 0 : index
    %12 = vector.load %arg3[%c0_6, %c0_7] : memref<192x32xbf16, #tpu.memory_space<vmem>>, vector<32x32xbf16>
    %cst_8 = arith.constant dense<0.000000e+00> : vector<256x32xf32>
    %13 = tpu.matmul %11, %12, %cst_8 {dimension_numbers = #tpu.dot_dimension_numbers<[1], [0], [0], [1], [0, 0, 1, 1], [], []>} : vector<256x32xbf16>, vector<32x32xbf16>, vector<256x32xf32> -> vector<256x32xf32>
    %c1 = arith.constant 1 : index
    %c0_9 = arith.constant 0 : index
    %14 = vector.load %arg5[%c1, %c0_9] : memref<4x32xf32, #tpu.memory_space<vmem>>, vector<1x32xf32>
    %15 = vector.broadcast %14 : vector<1x32xf32> to vector<256x32xf32>
    %16 = arith.addf %13, %15 : vector<256x32xf32>
    %cst_10 = arith.constant 0.000000e+00 : f32
    %17 = vector.broadcast %cst_10 : f32 to vector<256x32xf32>
    %18 = arith.maximumf %16, %17 : vector<256x32xf32>
    %19 = arith.truncf %18 : vector<256x32xf32> to vector<256x32xbf16>
    %c0_11 = arith.constant 0 : index
    %c0_12 = arith.constant 0 : index
    %20 = vector.load %arg4[%c0_11, %c0_12] : memref<64x128xbf16, #tpu.memory_space<vmem>>, vector<32x128xbf16>
    %cst_13 = arith.constant dense<0.000000e+00> : vector<256x128xf32>
    %21 = tpu.matmul %19, %20, %cst_13 {dimension_numbers = #tpu.dot_dimension_numbers<[1], [0], [0], [1], [0, 0, 1, 1], [], []>} : vector<256x32xbf16>, vector<32x128xbf16>, vector<256x128xf32> -> vector<256x128xf32>
    %22 = arith.addf %21, %4 : vector<256x128xf32>
    %c0_14 = arith.constant 0 : index
    %c0_15 = arith.constant 0 : index
    %23 = vector.load %arg6[%c0_14, %c0_15] : memref<4x128xf32, #tpu.memory_space<vmem>>, vector<1x128xf32>
    %24 = vector.broadcast %23 : vector<1x128xf32> to vector<256x128xf32>
    %25 = arith.mulf %22, %24 : vector<256x128xf32>
    %c1_16 = arith.constant 1 : index
    %c0_17 = arith.constant 0 : index
    %26 = vector.load %arg6[%c1_16, %c0_17] : memref<4x128xf32, #tpu.memory_space<vmem>>, vector<1x128xf32>
    %27 = vector.broadcast %26 : vector<1x128xf32> to vector<256x128xf32>
    %28 = arith.addf %25, %27 : vector<256x128xf32>
    %cst_18 = arith.constant 0.000000e+00 : f32
    %29 = vector.broadcast %cst_18 : f32 to vector<256x128xf32>
    %30 = arith.maximumf %28, %29 : vector<256x128xf32>
    %31 = arith.truncf %30 : vector<256x128xf32> to vector<256x128xbf16>
    %c32 = arith.constant 32 : index
    %c0_19 = arith.constant 0 : index
    %32 = vector.load %arg3[%c32, %c0_19] : memref<192x32xbf16, #tpu.memory_space<vmem>>, vector<128x32xbf16>
    %cst_20 = arith.constant dense<0.000000e+00> : vector<256x32xf32>
    %33 = tpu.matmul %31, %32, %cst_20 {dimension_numbers = #tpu.dot_dimension_numbers<[1], [0], [0], [1], [0, 0, 1, 1], [], []>} : vector<256x128xbf16>, vector<128x32xbf16>, vector<256x32xf32> -> vector<256x32xf32>
    %c2 = arith.constant 2 : index
    %c0_21 = arith.constant 0 : index
    %34 = vector.load %arg5[%c2, %c0_21] : memref<4x32xf32, #tpu.memory_space<vmem>>, vector<1x32xf32>
    %35 = vector.broadcast %34 : vector<1x32xf32> to vector<256x32xf32>
    %36 = arith.addf %33, %35 : vector<256x32xf32>
    %cst_22 = arith.constant 0.000000e+00 : f32
    %37 = vector.broadcast %cst_22 : f32 to vector<256x32xf32>
    %38 = arith.maximumf %36, %37 : vector<256x32xf32>
    %39 = arith.truncf %38 : vector<256x32xf32> to vector<256x32xbf16>
    %c160 = arith.constant 160 : index
    %c0_23 = arith.constant 0 : index
    %40 = vector.load %arg3[%c160, %c0_23] : memref<192x32xbf16, #tpu.memory_space<vmem>>, vector<32x32xbf16>
    %cst_24 = arith.constant dense<0.000000e+00> : vector<256x32xf32>
    %41 = tpu.matmul %39, %40, %cst_24 {dimension_numbers = #tpu.dot_dimension_numbers<[1], [0], [0], [1], [0, 0, 1, 1], [], []>} : vector<256x32xbf16>, vector<32x32xbf16>, vector<256x32xf32> -> vector<256x32xf32>
    %c3 = arith.constant 3 : index
    %c0_25 = arith.constant 0 : index
    %42 = vector.load %arg5[%c3, %c0_25] : memref<4x32xf32, #tpu.memory_space<vmem>>, vector<1x32xf32>
    %43 = vector.broadcast %42 : vector<1x32xf32> to vector<256x32xf32>
    %44 = arith.addf %41, %43 : vector<256x32xf32>
    %cst_26 = arith.constant 0.000000e+00 : f32
    %45 = vector.broadcast %cst_26 : f32 to vector<256x32xf32>
    %46 = arith.maximumf %44, %45 : vector<256x32xf32>
    %47 = arith.truncf %46 : vector<256x32xf32> to vector<256x32xbf16>
    %c32_27 = arith.constant 32 : index
    %c0_28 = arith.constant 0 : index
    %48 = vector.load %arg4[%c32_27, %c0_28] : memref<64x128xbf16, #tpu.memory_space<vmem>>, vector<32x128xbf16>
    %cst_29 = arith.constant dense<0.000000e+00> : vector<256x128xf32>
    %49 = tpu.matmul %47, %48, %cst_29 {dimension_numbers = #tpu.dot_dimension_numbers<[1], [0], [0], [1], [0, 0, 1, 1], [], []>} : vector<256x32xbf16>, vector<32x128xbf16>, vector<256x128xf32> -> vector<256x128xf32>
    %50 = arith.addf %49, %22 : vector<256x128xf32>
    %c2_30 = arith.constant 2 : index
    %c0_31 = arith.constant 0 : index
    %51 = vector.load %arg6[%c2_30, %c0_31] : memref<4x128xf32, #tpu.memory_space<vmem>>, vector<1x128xf32>
    %c3_32 = arith.constant 3 : index
    %c0_33 = arith.constant 0 : index
    %52 = vector.load %arg6[%c3_32, %c0_33] : memref<4x128xf32, #tpu.memory_space<vmem>>, vector<1x128xf32>
    %53 = vector.broadcast %51 : vector<1x128xf32> to vector<256x128xf32>
    %54 = arith.mulf %50, %53 : vector<256x128xf32>
    %55 = vector.broadcast %52 : vector<1x128xf32> to vector<256x128xf32>
    %56 = arith.addf %54, %55 : vector<256x128xf32>
    %cst_34 = arith.constant 0.000000e+00 : f32
    %57 = vector.broadcast %cst_34 : f32 to vector<256x128xf32>
    %58 = arith.maximumf %56, %57 : vector<256x128xf32>
    %c0_35 = arith.constant 0 : index
    %c0_36 = arith.constant 0 : index
    %59 = vector.load %arg7[%c0_35, %c0_36] : memref<256x128xf32, #tpu.memory_space<vmem>>, vector<256x128xf32>
    tpu.vector_store %arg7[%c0_35, %c0_36], %58 {strides = array<i32>} : memref<256x128xf32, #tpu.memory_space<vmem>>, vector<256x128xf32>,
    return
  }
  func.func @transform_0(%arg0: i32) -> (i32, i32) {
    %c0_i32 = arith.constant 0 : i32
    %c0_i32_0 = arith.constant 0 : i32
    return %arg0, %c0_i32 : i32, i32
  }
  func.func @transform_1(%arg0: i32) -> (i32, i32) {
    %c0_i32 = arith.constant 0 : i32
    %c0_i32_0 = arith.constant 0 : i32
    %c0_i32_1 = arith.constant 0 : i32
    return %c0_i32, %c0_i32_0 : i32, i32
  }
  func.func @transform_2(%arg0: i32) -> (i32, i32) {
    %c0_i32 = arith.constant 0 : i32
    %c0_i32_0 = arith.constant 0 : i32
    %c0_i32_1 = arith.constant 0 : i32
    return %c0_i32, %c0_i32_0 : i32, i32
  }
  func.func @transform_3(%arg0: i32) -> (i32, i32) {
    %c0_i32 = arith.constant 0 : i32
    %c0_i32_0 = arith.constant 0 : i32
    %c0_i32_1 = arith.constant 0 : i32
    return %c0_i32, %c0_i32_0 : i32, i32
  }
  func.func @transform_4(%arg0: i32) -> (i32, i32) {
    %c0_i32 = arith.constant 0 : i32
    %c0_i32_0 = arith.constant 0 : i32
    %c0_i32_1 = arith.constant 0 : i32
    return %c0_i32, %c0_i32_0 : i32, i32
  }
  func.func @transform_5(%arg0: i32) -> (i32, i32) {
    %c0_i32 = arith.constant 0 : i32
    %c0_i32_0 = arith.constant 0 : i32
    %c0_i32_1 = arith.constant 0 : i32
    return %c0_i32, %c0_i32_0 : i32, i32
  }
  func.func @transform_6(%arg0: i32) -> (i32, i32) {
    %c0_i32 = arith.constant 0 : i32
    %c0_i32_0 = arith.constant 0 : i32
    return %arg0, %c0_i32 : i32, i32
  }
}

</mosaic_0001>

<llo_original>
// kernel: tpu_custom_call.1
$region0: #{tpu_custom_call.1}
  #allocation0 [shape = 'u32[]', space=smem, size = 0x4, offset = 0x4, fixed_abs, tag = 'smem constant byte address 0x4 - core index']
  #allocation1 [shape = 'u32[144,128]{1,0:T(1,128)}', space=vmem, size = 0x12000, scoped, tag = 'internal scratch']
  %s0 = inlined_call_operand.vmem [shape: f32[2048,64], index: 0, kind: input, shape index: {}]
  %s1 = inlined_call_operand.vmem [shape: bf16[64,160], index: 1, kind: input, shape index: {}]
  %s2 = inlined_call_operand.vmem [shape: bf16[192,32], index: 2, kind: input, shape index: {}]
  %s3 = inlined_call_operand.vmem [shape: bf16[64,128], index: 3, kind: input, shape index: {}]
  %s4 = inlined_call_operand.vmem [shape: f32[4,32], index: 4, kind: input, shape index: {}]
  %s5 = inlined_call_operand.vmem [shape: f32[4,128], index: 5, kind: input, shape index: {}]
  %s6 = inlined_call_operand.hbm [shape: f32[2048,128], index: 6, kind: output, shape index: {}]
  %s7 = sld [smem:[#allocation0]]
  $region57: #{tpu_custom_call.1} parent=0
    _
  %s9 = ssub.s32 1, %s7
  %s10 = scalar_select 0, %s9, %s7
  $region1: #{tpu_custom_call.1} parent=0
    #allocation2 [shape = 'u8[262144]{0}', space=vmem, size = 0x40000, scoped, tag = 'output window, operand 0']
    #allocation3 [shape = 's32[2]{0}', space=sflag, size = 0x8, scoped, tag = 'scoped memory for tpu_custom_call.1']
    %11 = vsyncpa [#allocation3], 0
    %s12 = scalar_lea.sflag [#allocation3], 1
    %13 = vsyncpa %s12, 0
    loop: start=0, step=1, limit=10
    $region2: #{tpu_custom_call.1} parent=1 // loop_pre_header
      _
    $region3: #{tpu_custom_call.1} parent=1 // loop_header
      %s15 = sphi 0, %s19
      %p16 = scmp.ge.s32.totalorder %s15, 10
      %s25 = sphi 0, %s27
      %s28 = sphi 0, %s25
      %s29 = sphi 0, %s28
      %s45 = sphi 0, %s29
      %s49 = sphi 0, %s49
      %s51 = sphi 0, %s49
      %s52 = sphi 0, %s51
      %s66 = sphi 0, %s52
      %s70 = sphi 0, %s70
      %s72 = sphi 0, %s70
      %s73 = sphi 0, %s72
      %s87 = sphi 0, %s73
      %s91 = sphi 0, %s91
      %s93 = sphi 0, %s91
      %s94 = sphi 0, %s93
      %s108 = sphi 0, %s94
      %s112 = sphi 0, %s112
      %s114 = sphi 0, %s112
      %s115 = sphi 0, %s114
      %s129 = sphi 0, %s115
      %s133 = sphi 0, %s133
      %s135 = sphi 0, %s133
      %s136 = sphi 0, %s135
      %s150 = sphi 0, %s136
      %s156 = sphi 0, %s158
      %s159 = sphi 0, %s156
      %s160 = sphi 0, %s159
      %s176 = sphi 0, %s160
    $region4: #{tpu_custom_call.1} parent=1 // loop_header_branch
      %18 = sbr.rel (%p16) target = $region8
    $region5: #{tpu_custom_call.1} parent=1 // loop_body
      %s20 = ssub.s32 %s15, 1
      %s21 = ssub.s32 %s15, 2
      %s22 = sadd.s32 %s15, 1
      %s23 = ssub.s32 %s15, %s22
      %p24 = scmp.eq.s32.totalorder %s23, 0
      %s26 = sadd.s32 %s25, 1
      %s27 = scalar_select %p24, %s25, %s26
      %p30 = pneg %p24
      %p31 = scmp.eq.s32.totalorder %s15, 7
      %p32 = por %p30, %p31
      %p33 = scmp.ne.s32.totalorder %s25, %s28
      %p34 = scmp.eq.s32.totalorder %s15, 0
      %p35 = por %p33, %p34
      %p36 = scmp.ne.s32.totalorder %s25, %s28
      %p37 = scmp.eq.s32.totalorder %s20, 7
      %p38 = por %p36, %p37
      %p39 = scmp.ne.s32.totalorder %s28, %s29
      %p40 = scmp.eq.s32.totalorder %s20, 0
      %p41 = por %p39, %p40
      %p42 = scmp.ne.s32.totalorder %s28, %s29
      %p43 = scmp.eq.s32.totalorder %s21, 7
      %p44 = por %p42, %p43
      %p46 = scmp.ne.s32.totalorder %s29, %s45
      %p47 = scmp.eq.s32.totalorder %s21, 0
      %p48 = por %p46, %p47
      %s50 = sadd.s32 %s49, 1
      %p53 = scmp.eq.s32.totalorder %s15, 7
      %p54 = scmp.ne.s32.totalorder %s49, %s51
      %p55 = scmp.eq.s32.totalorder %s15, 0
      %p56 = por %p54, %p55
      %p57 = scmp.ne.s32.totalorder %s49, %s51
      %p58 = scmp.eq.s32.totalorder %s20, 7
      %p59 = por %p57, %p58
      %p60 = scmp.ne.s32.totalorder %s51, %s52
      %p61 = scmp.eq.s32.totalorder %s20, 0
      %p62 = por %p60, %p61
      %p63 = scmp.ne.s32.totalorder %s51, %s52
      %p64 = scmp.eq.s32.totalorder %s21, 7
      %p65 = por %p63, %p64
      %p67 = scmp.ne.s32.totalorder %s52, %s66
      %p68 = scmp.eq.s32.totalorder %s21, 0
      %p69 = por %p67, %p68
      %s71 = sadd.s32 %s70, 1
      %p74 = scmp.eq.s32.totalorder %s15, 7
      %p75 = scmp.ne.s32.totalorder %s70, %s72
      %p76 = scmp.eq.s32.totalorder %s15, 0
      %p77 = por %p75, %p76
      %p78 = scmp.ne.s32.totalorder %s70, %s72
      %p79 = scmp.eq.s32.totalorder %s20, 7
      %p80 = por %p78, %p79
      %p81 = scmp.ne.s32.totalorder %s72, %s73
      %p82 = scmp.eq.s32.totalorder %s20, 0
      %p83 = por %p81, %p82
      %p84 = scmp.ne.s32.totalorder %s72, %s73
      %p85 = scmp.eq.s32.totalorder %s21, 7
      %p86 = por %p84, %p85
      %p88 = scmp.ne.s32.totalorder %s73, %s87
      %p89 = scmp.eq.s32.totalorder %s21, 0
      %p90 = por %p88, %p89
      %s92 = sadd.s32 %s91, 1
      %p95 = scmp.eq.s32.totalorder %s15, 7
      %p96 = scmp.ne.s32.totalorder %s91, %s93
      %p97 = scmp.eq.s32.totalorder %s15, 0
      %p98 = por %p96, %p97
      %p99 = scmp.ne.s32.totalorder %s91, %s93
      %p100 = scmp.eq.s32.totalorder %s20, 7
      %p101 = por %p99, %p100
      %p102 = scmp.ne.s32.totalorder %s93, %s94
      %p103 = scmp.eq.s32.totalorder %s20, 0
      %p104 = por %p102, %p103
      %p105 = scmp.ne.s32.totalorder %s93, %s94
      %p106 = scmp.eq.s32.totalorder %s21, 7
      %p107 = por %p105, %p106
      %p109 = scmp.ne.s32.totalorder %s94, %s108
      %p110 = scmp.eq.s32.totalorder %s21, 0
      %p111 = por %p109, %p110
      %s113 = sadd.s32 %s112, 1
      %p116 = scmp.eq.s32.totalorder %s15, 7
      %p117 = scmp.ne.s32.totalorder %s112, %s114
      %p118 = scmp.eq.s32.totalorder %s15, 0
      %p119 = por %p117, %p118
      %p120 = scmp.ne.s32.totalorder %s112, %s114
      %p121 = scmp.eq.s32.totalorder %s20, 7
      %p122 = por %p120, %p121
      %p123 = scmp.ne.s32.totalorder %s114, %s115
      %p124 = scmp.eq.s32.totalorder %s20, 0
      %p125 = por %p123, %p124
      %p126 = scmp.ne.s32.totalorder %s114, %s115
      %p127 = scmp.eq.s32.totalorder %s21, 7
      %p128 = por %p126, %p127
      %p130 = scmp.ne.s32.totalorder %s115, %s129
      %p131 = scmp.eq.s32.totalorder %s21, 0
      %p132 = por %p130, %p131
      %s134 = sadd.s32 %s133, 1
      %p137 = scmp.eq.s32.totalorder %s15, 7
      %p138 = scmp.ne.s32.totalorder %s133, %s135
      %p139 = scmp.eq.s32.totalorder %s15, 0
      %p140 = por %p138, %p139
      %p141 = scmp.ne.s32.totalorder %s133, %s135
      %p142 = scmp.eq.s32.totalorder %s20, 7
      %p143 = por %p141, %p142
      %p144 = scmp.ne.s32.totalorder %s135, %s136
      %p145 = scmp.eq.s32.totalorder %s20, 0
      %p146 = por %p144, %p145
      %p147 = scmp.ne.s32.totalorder %s135, %s136
      %p148 = scmp.eq.s32.totalorder %s21, 7
      %p149 = por %p147, %p148
      %p151 = scmp.ne.s32.totalorder %s136, %s150
      %p152 = scmp.eq.s32.totalorder %s21, 0
      %p153 = por %p151, %p152
      %s154 = ssub.s32 %s15, %s22
      %p155 = scmp.eq.s32.totalorder %s154, 0
      %s157 = sadd.s32 %s156, 1
      %s158 = scalar_select %p155, %s156, %s157
      %p161 = pneg %p155
      %p162 = scmp.eq.s32.totalorder %s15, 7
      %p163 = por %p161, %p162
      %p164 = scmp.ne.s32.totalorder %s156, %s159
      %p165 = scmp.eq.s32.totalorder %s15, 0
      %p166 = por %p164, %p165
      %p167 = scmp.ne.s32.totalorder %s156, %s159
      %p168 = scmp.eq.s32.totalorder %s20, 7
      %p169 = por %p167, %p168
      %p170 = scmp.ne.s32.totalorder %s159, %s160
      %p171 = scmp.eq.s32.totalorder %s20, 0
      %p172 = por %p170, %p171
      %p173 = scmp.ne.s32.totalorder %s159, %s160
      %p174 = scmp.eq.s32.totalorder %s21, 7
      %p175 = por %p173, %p174
      %p177 = scmp.ne.s32.totalorder %s160, %s176
      %p178 = scmp.eq.s32.totalorder %s21, 0
      %p179 = por %p177, %p178
      %p180 = scmp.le.s32.totalorder 1, %s15
      %p181 = scmp.lt.s32.totalorder %s15, 9
      %p182 = pnand %p180, %p181
      %p183 = pneg %p182
      // Predicated region
      $region9: #{tpu_custom_call.1} parent=5 // pred_check
        _
      $region10: #{tpu_custom_call.1} parent=5 // pred_check_branch
        %185 = sbr.rel (%p182) target = $region12
      $region11: #{tpu_custom_call.1} parent=5 // pred_region
        %s186 = ssub.s32 %s15, 1
        // Predicated region
        $region13: #{tpu_custom_call.1} parent=11 // pred_check
          %p187 = pneg %p62
        $region14: #{tpu_custom_call.1} parent=11 // pred_check_branch
          %189 = sbr.rel (%p187) target = $region16
        $region15: #{tpu_custom_call.1} parent=11 // pred_region
          _
        $region16: #{tpu_custom_call.1} parent=11 // pred_fallthru
          _
        // Predicated region
        $region17: #{tpu_custom_call.1} parent=11 // pred_check
          %p190 = pneg %p83
        $region18: #{tpu_custom_call.1} parent=11 // pred_check_branch
          %192 = sbr.rel (%p190) target = $region20
        $region19: #{tpu_custom_call.1} parent=11 // pred_region
          _
        $region20: #{tpu_custom_call.1} parent=11 // pred_fallthru
          _
        // Predicated region
        $region21: #{tpu_custom_call.1} parent=11 // pred_check
          %p193 = pneg %p104
        $region22: #{tpu_custom_call.1} parent=11 // pred_check_branch
          %195 = sbr.rel (%p193) target = $region24
        $region23: #{tpu_custom_call.1} parent=11 // pred_region
          _
        $region24: #{tpu_custom_call.1} parent=11 // pred_fallthru
          _
        // Predicated region
        $region25: #{tpu_custom_call.1} parent=11 // pred_check
          %p196 = pneg %p125
        $region26: #{tpu_custom_call.1} parent=11 // pred_check_branch
          %198 = sbr.rel (%p196) target = $region28
        $region27: #{tpu_custom_call.1} parent=11 // pred_region
          _
        $region28: #{tpu_custom_call.1} parent=11 // pred_fallthru
          _
        // Predicated region
        $region29: #{tpu_custom_call.1} parent=11 // pred_check
          %p199 = pneg %p146
        $region30: #{tpu_custom_call.1} parent=11 // pred_check_branch
          %201 = sbr.rel (%p199) target = $region32
        $region31: #{tpu_custom_call.1} parent=11 // pred_region
          _
        $region32: #{tpu_custom_call.1} parent=11 // pred_fallthru
          _
      $region12: #{tpu_custom_call.1} parent=5 // pred_fallthru
        _
      %p202 = scmp.lt.s32.totalorder %s15, 8
      // Predicated region
      $region33: #{tpu_custom_call.1} parent=5 // pred_check
        %p203 = pneg %p202
      $region34: #{tpu_custom_call.1} parent=5 // pred_check_branch
        %205 = sbr.rel (%p203) target = $region36
      $region35: #{tpu_custom_call.1} parent=5 // pred_region
        // Predicated region
        $region37: #{tpu_custom_call.1} parent=35 // pred_check
          %p206 = pneg %p35
        $region38: #{tpu_custom_call.1} parent=35 // pred_check_branch
          %208 = sbr.rel (%p206) target = $region40
        $region39: #{tpu_custom_call.1} parent=35 // pred_region
          %s209 = smul.u32 32, %s15
          %p210 = scmp.lt.s32.totalorder %s209, 255
          %s211 = scalar_select %p210, %s209, 255
          %s212 = smul.addr %s211, 8
          %s213 = scalar_lea.vmem %s0, %s212
          %s214 = smul.u32 32, %s15
        $region40: #{tpu_custom_call.1} parent=35 // pred_fallthru
          _
      $region36: #{tpu_custom_call.1} parent=5 // pred_fallthru
        _
      %p215 = scmp.le.s32.totalorder 1, %s15
      %p216 = scmp.lt.s32.totalorder %s15, 9
      %p217 = pnand %p215, %p216
      %p218 = pneg %p217
      // Predicated region
      $region41: #{tpu_custom_call.1} parent=5 // pred_check
        _
      $region42: #{tpu_custom_call.1} parent=5 // pred_check_branch
        %220 = sbr.rel (%p217) target = $region44
      $region43: #{tpu_custom_call.1} parent=5 // pred_region
        %s221 = ssub.s32 %s15, 1
        %s222 = smul.u32 32, %s20
        %p223 = scmp.lt.s32.totalorder %s222, 255
        %s224 = scalar_select %p223, %s222, 255
        %s225 = smul.addr %s224, 8
        %s226 = scalar_lea.vmem %s0, %s225
        %p227 = pneg %p41
        %p228 = pneg %p38
        %p229 = pneg %p62
        %p230 = pneg %p59
        %p231 = pneg %p83
        %p232 = pneg %p80
        %p233 = pneg %p104
        %p234 = pneg %p101
        %p235 = pneg %p125
        %p236 = pneg %p122
        %p237 = pneg %p146
        %p238 = pneg %p143
        %p239 = pneg %p172
        %p240 = pneg %p169
        %s241 = sand.u32 %s159, 1
        %s242 = scalar_lea.sflag [#allocation3], %s241
        %s243 = sand.u32 %s159, 1
        %s244 = smul.addr %s243, 256
        %s245 = scalar_lea.vmem [#allocation2], %s244
        %s246 = smul.u32 32, %s20
        %p247 = scmp.lt.s32.totalorder %s246, 255
        %s248 = scalar_select %p247, %s246, 255
        %s249 = smul.addr %s248, 8
        %s250 = scalar_lea.vmem %s0, %s249
        %s251 = smul.u32 32, %s20
        %s252 = smul.u32 32, %s20
        %v254 = vld [vmem:[%s250] sm:$0xff]
        %v255 = vld [vmem:[%s250 + $0x8] sm:$0xff]
        %v256 = vld [vmem:[%s250 + $0x10] sm:$0xff]
        %v257 = vld [vmem:[%s250 + $0x18] sm:$0xff]
        %v258 = vld [vmem:[%s250 + $0x20] sm:$0xff]
        %v259 = vld [vmem:[%s250 + $0x28] sm:$0xff]
        %v260 = vld [vmem:[%s250 + $0x30] sm:$0xff]
        %v261 = vld [vmem:[%s250 + $0x38] sm:$0xff]
        %v262 = vld [vmem:[%s250 + $0x40] sm:$0xff]
        %v263 = vld [vmem:[%s250 + $0x48] sm:$0xff]
        %v264 = vld [vmem:[%s250 + $0x50] sm:$0xff]
        %v265 = vld [vmem:[%s250 + $0x58] sm:$0xff]
        %v266 = vld [vmem:[%s250 + $0x60] sm:$0xff]
        %v267 = vld [vmem:[%s250 + $0x68] sm:$0xff]
        %v268 = vld [vmem:[%s250 + $0x70] sm:$0xff]
        %v269 = vld [vmem:[%s250 + $0x78] sm:$0xff]
        %v270 = vld [vmem:[%s250 + $0x80] sm:$0xff]
        %v271 = vld [vmem:[%s250 + $0x88] sm:$0xff]
        %v272 = vld [vmem:[%s250 + $0x90] sm:$0xff]
        %v273 = vld [vmem:[%s250 + $0x98] sm:$0xff]
        %v274 = vld [vmem:[%s250 + $0xa0] sm:$0xff]
        %v275 = vld [vmem:[%s250 + $0xa8] sm:$0xff]
        %v276 = vld [vmem:[%s250 + $0xb0] sm:$0xff]
        %v277 = vld [vmem:[%s250 + $0xb8] sm:$0xff]
        %v278 = vld [vmem:[%s250 + $0xc0] sm:$0xff]
        %v279 = vld [vmem:[%s250 + $0xc8] sm:$0xff]
        %v280 = vld [vmem:[%s250 + $0xd0] sm:$0xff]
        %v281 = vld [vmem:[%s250 + $0xd8] sm:$0xff]
        %v282 = vld [vmem:[%s250 + $0xe0] sm:$0xff]
        %v283 = vld [vmem:[%s250 + $0xe8] sm:$0xff]
        %v284 = vld [vmem:[%s250 + $0xf0] sm:$0xff]
        %v285 = vld [vmem:[%s250 + $0xf8] sm:$0xff]
        %v286 = vpack.c.bf16 %v255, %v254
        %v287 = vpack.c.bf16 %v257, %v256
        %v288 = vpack.c.bf16 %v259, %v258
        %v289 = vpack.c.bf16 %v261, %v260
        %v290 = vpack.c.bf16 %v263, %v262
        %v291 = vpack.c.bf16 %v265, %v264
        %v292 = vpack.c.bf16 %v267, %v266
        %v293 = vpack.c.bf16 %v269, %v268
        %v294 = vpack.c.bf16 %v271, %v270
        %v295 = vpack.c.bf16 %v273, %v272
        %v296 = vpack.c.bf16 %v275, %v274
        %v297 = vpack.c.bf16 %v277, %v276
        %v298 = vpack.c.bf16 %v279, %v278
        %v299 = vpack.c.bf16 %v281, %v280
        %v300 = vpack.c.bf16 %v283, %v282
        %v301 = vpack.c.bf16 %v285, %v284
        %v302 = vld [vmem:[%s1] sm:$0xff]
        %v303 = vld [vmem:[%s1 + $0x8] sm:$0xff]
        %v304 = vld [vmem:[%s1 + $0x10] sm:$0xff]
        %v305 = vld [vmem:[%s1 + $0x18] sm:$0xff]
        %v306 = vld [vmem:[%s1 + $0x20] sm:$0xff]
        %v307 = vld [vmem:[%s1 + $0x28] sm:$0xff]
        %v308 = vld [vmem:[%s1 + $0x30] sm:$0xff]
        %v309 = vld [vmem:[%s1 + $0x38] sm:$0xff]
        %v318 = vunpack.c.l.b16 %v302
        %v319 = vunpack.c.h.b16 %v302
        %v320 = vunpack.c.l.b16 %v303
        %v321 = vunpack.c.h.b16 %v303
        %v322 = vunpack.c.l.b16 %v304
        %v323 = vunpack.c.h.b16 %v304
        %v324 = vunpack.c.l.b16 %v305
        %v325 = vunpack.c.h.b16 %v305
        %v326 = vunpack.c.l.b16 %v306
        %v327 = vunpack.c.h.b16 %v306
        %v328 = vunpack.c.l.b16 %v307
        %v329 = vunpack.c.h.b16 %v307
        %v330 = vunpack.c.l.b16 %v308
        %v331 = vunpack.c.h.b16 %v308
        %v332 = vunpack.c.l.b16 %v309
        %v333 = vunpack.c.h.b16 %v309
        %v334 = vpack.c.b16 %v320, %v318
        %v335 = vpack.c.b16 %v321, %v319
        %v336 = vpack.c.b16 %v324, %v322
        %v337 = vpack.c.b16 %v325, %v323
        %v338 = vpack.c.b16 %v328, %v326
        %v339 = vpack.c.b16 %v329, %v327
        %v340 = vpack.c.b16 %v332, %v330
        %v341 = vpack.c.b16 %v333, %v331
        %vm350 = vcmask 523264
        %v352 = vsel %vm350, %v286, 0
        %v355 = vsel %vm350, %v287, 0
        %v358 = vsel %vm350, %v288, 0
        %v361 = vsel %vm350, %v289, 0
        %v364 = vsel %vm350, %v290, 0
        %v367 = vsel %vm350, %v291, 0
        %v370 = vsel %vm350, %v292, 0
        %v373 = vsel %vm350, %v293, 0
        %v376 = vsel %vm350, %v294, 0
        %v379 = vsel %vm350, %v295, 0
        %v382 = vsel %vm350, %v296, 0
        %v385 = vsel %vm350, %v297, 0
        %v388 = vsel %vm350, %v298, 0
        %v391 = vsel %vm350, %v299, 0
        %v394 = vsel %vm350, %v300, 0
        %v397 = vsel %vm350, %v301, 0
        %399 = vmatprep.subr.bf16.mxu0 %v335
        %400 = vmatpush1.bf16.msra.mxu0 %v334
        %401 = vmatprep.subr.bf16.mxu0 %v337
        %402 = vmatpush1.bf16.msra.mxu0 %v336
        %403 = vmatprep.subr.bf16.mxu0 %v339
        %404 = vmatpush1.bf16.msra.mxu0 %v338
        %405 = vmatprep.subr.bf16.mxu0 %v341
        %406 = vmatpush1.bf16.msra.mxu0 %v340
        %407 = vmatprep.subr.bf16.mxu0 0
        %408 = vmatpush1.bf16.msra.mxu0 0
        %409 = vmatprep.subr.bf16.mxu0 0
        %410 = vmatpush1.bf16.msra.mxu0 0
        %411 = vmatprep.subr.bf16.mxu0 0
        %412 = vmatpush1.bf16.msra.mxu0 0
        %413 = vmatprep.subr.bf16.mxu0 0
        %414 = vmatpush1.bf16.msra.mxu0 0
        %415 = vmatprep.subr.bf16.mxu0 0
        %416 = vmatpush1.bf16.msra.mxu0 0
        %417 = vmatprep.subr.bf16.mxu0 0
        %418 = vmatpush1.bf16.msra.mxu0 0
        %419 = vmatprep.subr.bf16.mxu0 0
        %420 = vmatpush1.bf16.msra.mxu0 0
        %421 = vmatprep.subr.bf16.mxu0 0
        %422 = vmatpush1.bf16.msra.mxu0 0
        %423 = vmatprep.subr.bf16.mxu0 0
        %424 = vmatpush1.bf16.msra.mxu0 0
        %425 = vmatprep.subr.bf16.mxu0 0
        %426 = vmatpush1.bf16.msra.mxu0 0
        %427 = vmatprep.subr.bf16.mxu0 0
        %428 = vmatpush1.bf16.msra.mxu0 0
        %429 = vmatprep.subr.bf16.mxu0 0
        %430 = vmatpush1.bf16.msra.mxu0 0
        %431 = vmatprep.mubr.bf16.mxu0 0
        %432 = vmatmul.mubr.bf16.gmra.mrb[0].mxu0 %v352
        %v433 = vpop.f32.mrb[0].mxu0
        %v434 = vadd.f32 0.0, %v433
        %v435 = vpop.f32.mrb[0].mxu0
        %v436 = vadd.f32 0.0, %v435
        %v437 = vpop.f32.mrb[0].mxu0
        %v438 = vadd.f32 0.0, %v437
        %v439 = vpop.f32.mrb[0].mxu0
        %v440 = vadd.f32 0.0, %v439
        %441 = vmatprep.mubr.bf16.mxu0 0
        %442 = vmatmul.mubr.bf16.gmra.mrb[0].mxu0 %v355
        %v443 = vpop.f32.mrb[0].mxu0
        %v444 = vadd.f32 0.0, %v443
        %v445 = vpop.f32.mrb[0].mxu0
        %v446 = vadd.f32 0.0, %v445
        %v447 = vpop.f32.mrb[0].mxu0
        %v448 = vadd.f32 0.0, %v447
        %v449 = vpop.f32.mrb[0].mxu0
        %v450 = vadd.f32 0.0, %v449
        %451 = vmatprep.mubr.bf16.mxu0 0
        %452 = vmatmul.mubr.bf16.gmra.mrb[0].mxu0 %v358
        %v453 = vpop.f32.mrb[0].mxu0
        %v454 = vadd.f32 0.0, %v453
        %v455 = vpop.f32.mrb[0].mxu0
        %v456 = vadd.f32 0.0, %v455
        %v457 = vpop.f32.mrb[0].mxu0
        %v458 = vadd.f32 0.0, %v457
        %v459 = vpop.f32.mrb[0].mxu0
        %v460 = vadd.f32 0.0, %v459
        %461 = vmatprep.mubr.bf16.mxu0 0
        %462 = vmatmul.mubr.bf16.gmra.mrb[0].mxu0 %v361
        %v463 = vpop.f32.mrb[0].mxu0
        %v464 = vadd.f32 0.0, %v463
        %v465 = vpop.f32.mrb[0].mxu0
        %v466 = vadd.f32 0.0, %v465
        %v467 = vpop.f32.mrb[0].mxu0
        %v468 = vadd.f32 0.0, %v467
        %v469 = vpop.f32.mrb[0].mxu0
        %v470 = vadd.f32 0.0, %v469
        %471 = vmatprep.mubr.bf16.mxu0 0
        %472 = vmatmul.mubr.bf16.gmra.mrb[0].mxu0 %v364
        %v473 = vpop.f32.mrb[0].mxu0
        %v474 = vadd.f32 0.0, %v473
        %v475 = vpop.f32.mrb[0].mxu0
        %v476 = vadd.f32 0.0, %v475
        %v477 = vpop.f32.mrb[0].mxu0
        %v478 = vadd.f32 0.0, %v477
        %v479 = vpop.f32.mrb[0].mxu0
        %v480 = vadd.f32 0.0, %v479
        %481 = vmatprep.mubr.bf16.mxu0 0
        %482 = vmatmul.mubr.bf16.gmra.mrb[0].mxu0 %v367
        %v483 = vpop.f32.mrb[0].mxu0
        %v484 = vadd.f32 0.0, %v483
        %v485 = vpop.f32.mrb[0].mxu0
        %v486 = vadd.f32 0.0, %v485
        %v487 = vpop.f32.mrb[0].mxu0
        %v488 = vadd.f32 0.0, %v487
        %v489 = vpop.f32.mrb[0].mxu0
        %v490 = vadd.f32 0.0, %v489
        %491 = vmatprep.mubr.bf16.mxu0 0
        %492 = vmatmul.mubr.bf16.gmra.mrb[0].mxu0 %v370
        %v493 = vpop.f32.mrb[0].mxu0
        %v494 = vadd.f32 0.0, %v493
        %v495 = vpop.f32.mrb[0].mxu0
        %v496 = vadd.f32 0.0, %v495
        %v497 = vpop.f32.mrb[0].mxu0
        %v498 = vadd.f32 0.0, %v497
        %v499 = vpop.f32.mrb[0].mxu0
        %v500 = vadd.f32 0.0, %v499
        %501 = vmatprep.mubr.bf16.mxu0 0
        %502 = vmatmul.mubr.bf16.gmra.mrb[0].mxu0 %v373
        %v503 = vpop.f32.mrb[0].mxu0
        %v504 = vadd.f32 0.0, %v503
        %v505 = vpop.f32.mrb[0].mxu0
        %v506 = vadd.f32 0.0, %v505
        %v507 = vpop.f32.mrb[0].mxu0
        %v508 = vadd.f32 0.0, %v507
        %v509 = vpop.f32.mrb[0].mxu0
        %v510 = vadd.f32 0.0, %v509
        %511 = vmatprep.mubr.bf16.mxu0 0
        %512 = vmatmul.mubr.bf16.gmra.mrb[0].mxu0 %v376
        %v513 = vpop.f32.mrb[0].mxu0
        %v514 = vadd.f32 0.0, %v513
        %v515 = vpop.f32.mrb[0].mxu0
        %v516 = vadd.f32 0.0, %v515
        %v517 = vpop.f32.mrb[0].mxu0
        %v518 = vadd.f32 0.0, %v517
        %v519 = vpop.f32.mrb[0].mxu0
        %v520 = vadd.f32 0.0, %v519
        %521 = vmatprep.mubr.bf16.mxu0 0
        %522 = vmatmul.mubr.bf16.gmra.mrb[0].mxu0 %v379
        %v523 = vpop.f32.mrb[0].mxu0
        %v524 = vadd.f32 0.0, %v523
        %v525 = vpop.f32.mrb[0].mxu0
        %v526 = vadd.f32 0.0, %v525
        %v527 = vpop.f32.mrb[0].mxu0
        %v528 = vadd.f32 0.0, %v527
        %v529 = vpop.f32.mrb[0].mxu0
        %v530 = vadd.f32 0.0, %v529
        %531 = vmatprep.mubr.bf16.mxu0 0
        %532 = vmatmul.mubr.bf16.gmra.mrb[0].mxu0 %v382
        %v533 = vpop.f32.mrb[0].mxu0
        %v534 = vadd.f32 0.0, %v533
        %v535 = vpop.f32.mrb[0].mxu0
        %v536 = vadd.f32 0.0, %v535
        %v537 = vpop.f32.mrb[0].mxu0
        %v538 = vadd.f32 0.0, %v537
        %v539 = vpop.f32.mrb[0].mxu0
        %v540 = vadd.f32 0.0, %v539
        %541 = vmatprep.mubr.bf16.mxu0 0
        %542 = vmatmul.mubr.bf16.gmra.mrb[0].mxu0 %v385
        %v543 = vpop.f32.mrb[0].mxu0
        %v544 = vadd.f32 0.0, %v543
        %v545 = vpop.f32.mrb[0].mxu0
        %v546 = vadd.f32 0.0, %v545
        %v547 = vpop.f32.mrb[0].mxu0
        %v548 = vadd.f32 0.0, %v547
        %v549 = vpop.f32.mrb[0].mxu0
        %v550 = vadd.f32 0.0, %v549
        %551 = vmatprep.mubr.bf16.mxu0 0
        %552 = vmatmul.mubr.bf16.gmra.mrb[0].mxu0 %v388
        %v553 = vpop.f32.mrb[0].mxu0
        %v554 = vadd.f32 0.0, %v553
        %v555 = vpop.f32.mrb[0].mxu0
        %v556 = vadd.f32 0.0, %v555
        %v557 = vpop.f32.mrb[0].mxu0
        %v558 = vadd.f32 0.0, %v557
        %v559 = vpop.f32.mrb[0].mxu0
        %v560 = vadd.f32 0.0, %v559
        %561 = vmatprep.mubr.bf16.mxu0 0
        %562 = vmatmul.mubr.bf16.gmra.mrb[0].mxu0 %v391
        %v563 = vpop.f32.mrb[0].mxu0
        %v564 = vadd.f32 0.0, %v563
        %v565 = vpop.f32.mrb[0].mxu0
        %v566 = vadd.f32 0.0, %v565
        %v567 = vpop.f32.mrb[0].mxu0
        %v568 = vadd.f32 0.0, %v567
        %v569 = vpop.f32.mrb[0].mxu0
        %v570 = vadd.f32 0.0, %v569
        %571 = vmatprep.mubr.bf16.mxu0 0
        %572 = vmatmul.mubr.bf16.gmra.mrb[0].mxu0 %v394
        %v573 = vpop.f32.mrb[0].mxu0
        %v574 = vadd.f32 0.0, %v573
        %v575 = vpop.f32.mrb[0].mxu0
        %v576 = vadd.f32 0.0, %v575
        %v577 = vpop.f32.mrb[0].mxu0
        %v578 = vadd.f32 0.0, %v577
        %v579 = vpop.f32.mrb[0].mxu0
        %v580 = vadd.f32 0.0, %v579
        %581 = vmatprep.mubr.bf16.mxu0 0
        %582 = vmatmul.mubr.bf16.gmra.mrb[0].mxu0 %v397
        %v583 = vpop.f32.mrb[0].mxu0
        %v584 = vadd.f32 0.0, %v583
        %v585 = vpop.f32.mrb[0].mxu0
        %v586 = vadd.f32 0.0, %v585
        %v587 = vpop.f32.mrb[0].mxu0
        %v588 = vadd.f32 0.0, %v587
        %v589 = vpop.f32.mrb[0].mxu0
        %v590 = vadd.f32 0.0, %v589
        %591 = vdwg.mxu0
        %v592 = vld [vmem:[%s4] sm:$0x1]
        %v593 = vlaneseq
        %v594 = vshrl.u32 %v593, 7
        %v595 = vsub.s32 0, %v594
        %v596 = vrot.slane %v592, %v595
        %v597 = vadd.f32 %v436, %v596
        %v598 = vadd.f32 %v440, %v596
        %v599 = vadd.f32 %v446, %v596
        %v600 = vadd.f32 %v450, %v596
        %v601 = vadd.f32 %v456, %v596
        %v602 = vadd.f32 %v460, %v596
        %v603 = vadd.f32 %v466, %v596
        %v604 = vadd.f32 %v470, %v596
        %v605 = vadd.f32 %v476, %v596
        %v606 = vadd.f32 %v480, %v596
        %v607 = vadd.f32 %v486, %v596
        %v608 = vadd.f32 %v490, %v596
        %v609 = vadd.f32 %v496, %v596
        %v610 = vadd.f32 %v500, %v596
        %v611 = vadd.f32 %v506, %v596
        %v612 = vadd.f32 %v510, %v596
        %v613 = vadd.f32 %v516, %v596
        %v614 = vadd.f32 %v520, %v596
        %v615 = vadd.f32 %v526, %v596
        %v616 = vadd.f32 %v530, %v596
        %v617 = vadd.f32 %v536, %v596
        %v618 = vadd.f32 %v540, %v596
        %v619 = vadd.f32 %v546, %v596
        %v620 = vadd.f32 %v550, %v596
        %v621 = vadd.f32 %v556, %v596
        %v622 = vadd.f32 %v560, %v596
        %v623 = vadd.f32 %v566, %v596
        %v624 = vadd.f32 %v570, %v596
        %v625 = vadd.f32 %v576, %v596
        %v626 = vadd.f32 %v580, %v596
        %v627 = vadd.f32 %v586, %v596
        %v628 = vadd.f32 %v590, %v596
        %v629 = vmax.f32 %v597, 0.0
        %v630 = vmax.f32 %v598, 0.0
        %v631 = vmax.f32 %v599, 0.0
        %v632 = vmax.f32 %v600, 0.0
        %v633 = vmax.f32 %v601, 0.0
        %v634 = vmax.f32 %v602, 0.0
        %v635 = vmax.f32 %v603, 0.0
        %v636 = vmax.f32 %v604, 0.0
        %v637 = vmax.f32 %v605, 0.0
        %v638 = vmax.f32 %v606, 0.0
        %v639 = vmax.f32 %v607, 0.0
        %v640 = vmax.f32 %v608, 0.0
        %v641 = vmax.f32 %v609, 0.0
        %v642 = vmax.f32 %v610, 0.0
        %v643 = vmax.f32 %v611, 0.0
        %v644 = vmax.f32 %v612, 0.0
        %v645 = vmax.f32 %v613, 0.0
        %v646 = vmax.f32 %v614, 0.0
        %v647 = vmax.f32 %v615, 0.0
        %v648 = vmax.f32 %v616, 0.0
        %v649 = vmax.f32 %v617, 0.0
        %v650 = vmax.f32 %v618, 0.0
        %v651 = vmax.f32 %v619, 0.0
        %v652 = vmax.f32 %v620, 0.0
        %v653 = vmax.f32 %v621, 0.0
        %v654 = vmax.f32 %v622, 0.0
        %v655 = vmax.f32 %v623, 0.0
        %v656 = vmax.f32 %v624, 0.0
        %v657 = vmax.f32 %v625, 0.0
        %v658 = vmax.f32 %v626, 0.0
        %v659 = vmax.f32 %v627, 0.0
        %v660 = vmax.f32 %v628, 0.0
        %v661 = vpack.c.bf16 %v630, %v629
        %v662 = vpack.c.bf16 %v632, %v631
        %v663 = vpack.c.bf16 %v634, %v633
        %v664 = vpack.c.bf16 %v636, %v635
        %v665 = vpack.c.bf16 %v638, %v637
        %v666 = vpack.c.bf16 %v640, %v639
        %v667 = vpack.c.bf16 %v642, %v641
        %v668 = vpack.c.bf16 %v644, %v643
        %v669 = vpack.c.bf16 %v646, %v645
        %v670 = vpack.c.bf16 %v648, %v647
        %v671 = vpack.c.bf16 %v650, %v649
        %v672 = vpack.c.bf16 %v652, %v651
        %v673 = vpack.c.bf16 %v654, %v653
        %v674 = vpack.c.bf16 %v656, %v655
        %v675 = vpack.c.bf16 %v658, %v657
        %v676 = vpack.c.bf16 %v660, %v659
        %v677 = vld [vmem:[%s2] sm:$0xf]
        %v678 = vld [vmem:[%s2 + $0x4] sm:$0xf]
        %v679 = vld [vmem:[%s2 + $0x8] sm:$0xf]
        %v680 = vld [vmem:[%s2 + $0xc] sm:$0xf]
        %v681 = vld [vmem:[%s4 + $0x1] sm:$0x1]
        %v682 = vlaneseq
        %v683 = vshrl.u32 %v682, 7
        %v684 = vsub.s32 0, %v683
        %v685 = vrot.slane %v681, %v684
        %v690 = vunpack.c.l.b16 %v677
        %v691 = vunpack.c.l.b16 %v678
        %v692 = vunpack.c.l.b16 %v679
        %v693 = vunpack.c.l.b16 %v680
        %v694 = vpack.c.b16 %v691, %v690
        %v695 = vpack.c.b16 %v693, %v692
        %vm698 = vcmask 261120
        %v700 = vsel %vm698, %v661, 0
        %v703 = vsel %vm698, %v662, 0
        %v706 = vsel %vm698, %v663, 0
        %v709 = vsel %vm698, %v664, 0
        %v712 = vsel %vm698, %v665, 0
        %v715 = vsel %vm698, %v666, 0
        %v718 = vsel %vm698, %v667, 0
        %v721 = vsel %vm698, %v668, 0
        %v724 = vsel %vm698, %v669, 0
        %v727 = vsel %vm698, %v670, 0
        %v730 = vsel %vm698, %v671, 0
        %v733 = vsel %vm698, %v672, 0
        %v736 = vsel %vm698, %v673, 0
        %v739 = vsel %vm698, %v674, 0
        %v742 = vsel %vm698, %v675, 0
        %v745 = vsel %vm698, %v676, 0
        %747 = vmatprep.subr.bf16.mxu0 0
        %748 = vmatpush1.bf16.msra.mxu0 %v694
        %749 = vmatprep.subr.bf16.mxu0 0
        %750 = vmatpush1.bf16.msra.mxu0 %v695
        %751 = vmatprep.subr.bf16.mxu0 0
        %752 = vmatpush1.bf16.msra.mxu0 0
        %753 = vmatprep.subr.bf16.mxu0 0
        %754 = vmatpush1.bf16.msra.mxu0 0
        %755 = vmatprep.subr.bf16.mxu0 0
        %756 = vmatpush1.bf16.msra.mxu0 0
        %757 = vmatprep.subr.bf16.mxu0 0
        %758 = vmatpush1.bf16.msra.mxu0 0
        %759 = vmatprep.subr.bf16.mxu0 0
        %760 = vmatpush1.bf16.msra.mxu0 0
        %761 = vmatprep.subr.bf16.mxu0 0
        %762 = vmatpush1.bf16.msra.mxu0 0
        %763 = vmatprep.subr.bf16.mxu0 0
        %764 = vmatpush1.bf16.msra.mxu0 0
        %765 = vmatprep.subr.bf16.mxu0 0
        %766 = vmatpush1.bf16.msra.mxu0 0
        %767 = vmatprep.subr.bf16.mxu0 0
        %768 = vmatpush1.bf16.msra.mxu0 0
        %769 = vmatprep.subr.bf16.mxu0 0
        %770 = vmatpush1.bf16.msra.mxu0 0
        %771 = vmatprep.subr.bf16.mxu0 0
        %772 = vmatpush1.bf16.msra.mxu0 0
        %773 = vmatprep.subr.bf16.mxu0 0
        %774 = vmatpush1.bf16.msra.mxu0 0
        %775 = vmatprep.subr.bf16.mxu0 0
        %776 = vmatpush1.bf16.msra.mxu0 0
        %777 = vmatprep.subr.bf16.mxu0 0
        %778 = vmatpush1.bf16.msra.mxu0 0
        %779 = vmatprep.mubr.bf16.mxu0 0
        %780 = vmatmul.mubr.bf16.gmra.mrb[0].mxu0 %v700
        %v781 = vpop.f32.mrb[0].mxu0
        %v782 = vadd.f32 %v685, %v781
        %v783 = vpop.f32.mrb[0].mxu0
        %v784 = vpop.f32.mrb[0].mxu0
        %v785 = vadd.f32 %v685, %v784
        %v786 = vpop.f32.mrb[0].mxu0
        %787 = vmatprep.mubr.bf16.mxu0 0
        %788 = vmatmul.mubr.bf16.gmra.mrb[0].mxu0 %v703
        %v789 = vpop.f32.mrb[0].mxu0
        %v790 = vadd.f32 %v685, %v789
        %v791 = vpop.f32.mrb[0].mxu0
        %v792 = vpop.f32.mrb[0].mxu0
        %v793 = vadd.f32 %v685, %v792
        %v794 = vpop.f32.mrb[0].mxu0
        %795 = vmatprep.mubr.bf16.mxu0 0
        %796 = vmatmul.mubr.bf16.gmra.mrb[0].mxu0 %v706
        %v797 = vpop.f32.mrb[0].mxu0
        %v798 = vadd.f32 %v685, %v797
        %v799 = vpop.f32.mrb[0].mxu0
        %v800 = vpop.f32.mrb[0].mxu0
        %v801 = vadd.f32 %v685, %v800
        %v802 = vpop.f32.mrb[0].mxu0
        %803 = vmatprep.mubr.bf16.mxu0 0
        %804 = vmatmul.mubr.bf16.gmra.mrb[0].mxu0 %v709
        %v805 = vpop.f32.mrb[0].mxu0
        %v806 = vadd.f32 %v685, %v805
        %v807 = vpop.f32.mrb[0].mxu0
        %v808 = vpop.f32.mrb[0].mxu0
        %v809 = vadd.f32 %v685, %v808
        %v810 = vpop.f32.mrb[0].mxu0
        %811 = vmatprep.mubr.bf16.mxu0 0
        %812 = vmatmul.mubr.bf16.gmra.mrb[0].mxu0 %v712
        %v813 = vpop.f32.mrb[0].mxu0
        %v814 = vadd.f32 %v685, %v813
        %v815 = vpop.f32.mrb[0].mxu0
        %v816 = vpop.f32.mrb[0].mxu0
        %v817 = vadd.f32 %v685, %v816
        %v818 = vpop.f32.mrb[0].mxu0
        %819 = vmatprep.mubr.bf16.mxu0 0
        %820 = vmatmul.mubr.bf16.gmra.mrb[0].mxu0 %v715
        %v821 = vpop.f32.mrb[0].mxu0
        %v822 = vadd.f32 %v685, %v821
        %v823 = vpop.f32.mrb[0].mxu0
        %v824 = vpop.f32.mrb[0].mxu0
        %v825 = vadd.f32 %v685, %v824
        %v826 = vpop.f32.mrb[0].mxu0
        %827 = vmatprep.mubr.bf16.mxu0 0
        %828 = vmatmul.mubr.bf16.gmra.mrb[0].mxu0 %v718
        %v829 = vpop.f32.mrb[0].mxu0
        %v830 = vadd.f32 %v685, %v829
        %v831 = vpop.f32.mrb[0].mxu0
        %v832 = vpop.f32.mrb[0].mxu0
        %v833 = vadd.f32 %v685, %v832
        %v834 = vpop.f32.mrb[0].mxu0
        %835 = vmatprep.mubr.bf16.mxu0 0
        %836 = vmatmul.mubr.bf16.gmra.mrb[0].mxu0 %v721
        %v837 = vpop.f32.mrb[0].mxu0
        %v838 = vadd.f32 %v685, %v837
        %v839 = vpop.f32.mrb[0].mxu0
        %v840 = vpop.f32.mrb[0].mxu0
        %v841 = vadd.f32 %v685, %v840
        %v842 = vpop.f32.mrb[0].mxu0
        %843 = vmatprep.mubr.bf16.mxu0 0
        %844 = vmatmul.mubr.bf16.gmra.mrb[0].mxu0 %v724
        %v845 = vpop.f32.mrb[0].mxu0
        %v846 = vadd.f32 %v685, %v845
        %v847 = vpop.f32.mrb[0].mxu0
        %v848 = vpop.f32.mrb[0].mxu0
        %v849 = vadd.f32 %v685, %v848
        %v850 = vpop.f32.mrb[0].mxu0
        %851 = vmatprep.mubr.bf16.mxu0 0
        %852 = vmatmul.mubr.bf16.gmra.mrb[0].mxu0 %v727
        %v853 = vpop.f32.mrb[0].mxu0
        %v854 = vadd.f32 %v685, %v853
        %v855 = vpop.f32.mrb[0].mxu0
        %v856 = vpop.f32.mrb[0].mxu0
        %v857 = vadd.f32 %v685, %v856
        %v858 = vpop.f32.mrb[0].mxu0
        %859 = vmatprep.mubr.bf16.mxu0 0
        %860 = vmatmul.mubr.bf16.gmra.mrb[0].mxu0 %v730
        %v861 = vpop.f32.mrb[0].mxu0
        %v862 = vadd.f32 %v685, %v861
        %v863 = vpop.f32.mrb[0].mxu0
        %v864 = vpop.f32.mrb[0].mxu0
        %v865 = vadd.f32 %v685, %v864
        %v866 = vpop.f32.mrb[0].mxu0
        %867 = vmatprep.mubr.bf16.mxu0 0
        %868 = vmatmul.mubr.bf16.gmra.mrb[0].mxu0 %v733
        %v869 = vpop.f32.mrb[0].mxu0
        %v870 = vadd.f32 %v685, %v869
        %v871 = vpop.f32.mrb[0].mxu0
        %v872 = vpop.f32.mrb[0].mxu0
        %v873 = vadd.f32 %v685, %v872
        %v874 = vpop.f32.mrb[0].mxu0
        %875 = vmatprep.mubr.bf16.mxu0 0
        %876 = vmatmul.mubr.bf16.gmra.mrb[0].mxu0 %v736
        %v877 = vpop.f32.mrb[0].mxu0
        %v878 = vadd.f32 %v685, %v877
        %v879 = vpop.f32.mrb[0].mxu0
        %v880 = vpop.f32.mrb[0].mxu0
        %v881 = vadd.f32 %v685, %v880
        %v882 = vpop.f32.mrb[0].mxu0
        %883 = vmatprep.mubr.bf16.mxu0 0
        %884 = vmatmul.mubr.bf16.gmra.mrb[0].mxu0 %v739
        %v885 = vpop.f32.mrb[0].mxu0
        %v886 = vadd.f32 %v685, %v885
        %v887 = vpop.f32.mrb[0].mxu0
        %v888 = vpop.f32.mrb[0].mxu0
        %v889 = vadd.f32 %v685, %v888
        %v890 = vpop.f32.mrb[0].mxu0
        %891 = vmatprep.mubr.bf16.mxu0 0
        %892 = vmatmul.mubr.bf16.gmra.mrb[0].mxu0 %v742
        %v893 = vpop.f32.mrb[0].mxu0
        %v894 = vadd.f32 %v685, %v893
        %v895 = vpop.f32.mrb[0].mxu0
        %v896 = vpop.f32.mrb[0].mxu0
        %v897 = vadd.f32 %v685, %v896
        %v898 = vpop.f32.mrb[0].mxu0
        %899 = vmatprep.mubr.bf16.mxu0 0
        %900 = vmatmul.mubr.bf16.gmra.mrb[0].mxu0 %v745
        %v901 = vpop.f32.mrb[0].mxu0
        %v902 = vadd.f32 %v685, %v901
        %v903 = vpop.f32.mrb[0].mxu0
        %v904 = vpop.f32.mrb[0].mxu0
        %v905 = vadd.f32 %v685, %v904
        %v906 = vpop.f32.mrb[0].mxu0
        %907 = vdwg.mxu0
        %v908 = vmax.f32 %v782, 0.0
        %v909 = vmax.f32 %v785, 0.0
        %v910 = vmax.f32 %v790, 0.0
        %v911 = vmax.f32 %v793, 0.0
        %v912 = vmax.f32 %v798, 0.0
        %v913 = vmax.f32 %v801, 0.0
        %v914 = vmax.f32 %v806, 0.0
        %v915 = vmax.f32 %v809, 0.0
        %v916 = vmax.f32 %v814, 0.0
        %v917 = vmax.f32 %v817, 0.0
        %v918 = vmax.f32 %v822, 0.0
        %v919 = vmax.f32 %v825, 0.0
        %v920 = vmax.f32 %v830, 0.0
        %v921 = vmax.f32 %v833, 0.0
        %v922 = vmax.f32 %v838, 0.0
        %v923 = vmax.f32 %v841, 0.0
        %v924 = vmax.f32 %v846, 0.0
        %v925 = vmax.f32 %v849, 0.0
        %v926 = vmax.f32 %v854, 0.0
        %v927 = vmax.f32 %v857, 0.0
        %v928 = vmax.f32 %v862, 0.0
        %v929 = vmax.f32 %v865, 0.0
        %v930 = vmax.f32 %v870, 0.0
        %v931 = vmax.f32 %v873, 0.0
        %v932 = vmax.f32 %v878, 0.0
        %v933 = vmax.f32 %v881, 0.0
        %v934 = vmax.f32 %v886, 0.0
        %v935 = vmax.f32 %v889, 0.0
        %v936 = vmax.f32 %v894, 0.0
        %v937 = vmax.f32 %v897, 0.0
        %v938 = vmax.f32 %v902, 0.0
        %v939 = vmax.f32 %v905, 0.0
        %v940 = vpack.c.bf16 %v909, %v908
        %v941 = vpack.c.bf16 %v911, %v910
        %v942 = vpack.c.bf16 %v913, %v912
        %v943 = vpack.c.bf16 %v915, %v914
        %v944 = vpack.c.bf16 %v917, %v916
        %v945 = vpack.c.bf16 %v919, %v918
        %v946 = vpack.c.bf16 %v921, %v920
        %v947 = vpack.c.bf16 %v923, %v922
        %v948 = vpack.c.bf16 %v925, %v924
        %v949 = vpack.c.bf16 %v927, %v926
        %v950 = vpack.c.bf16 %v929, %v928
        %v951 = vpack.c.bf16 %v931, %v930
        %v952 = vpack.c.bf16 %v933, %v932
        %v953 = vpack.c.bf16 %v935, %v934
        %v954 = vpack.c.bf16 %v937, %v936
        %v955 = vpack.c.bf16 %v939, %v938
        %v956 = vld [vmem:[%s3] sm:$0xf]
        %v957 = vld [vmem:[%s3 + $0x4] sm:$0xf]
        %v958 = vld [vmem:[%s3 + $0x8] sm:$0xf]
        %v959 = vld [vmem:[%s3 + $0xc] sm:$0xf]
        %v964 = vunpack.c.l.b16 %v956
        %v965 = vunpack.c.l.b16 %v957
        %v966 = vunpack.c.l.b16 %v958
        %v967 = vunpack.c.l.b16 %v959
        %v968 = vpack.c.b16 %v965, %v964
        %v969 = vpack.c.b16 %v967, %v966
        %v973 = vsel %vm698, %v940, 0
        %v976 = vsel %vm698, %v941, 0
        %v979 = vsel %vm698, %v942, 0
        %v982 = vsel %vm698, %v943, 0
        %v985 = vsel %vm698, %v944, 0
        %v988 = vsel %vm698, %v945, 0
        %v991 = vsel %vm698, %v946, 0
        %v994 = vsel %vm698, %v947, 0
        %v997 = vsel %vm698, %v948, 0
        %v1000 = vsel %vm698, %v949, 0
        %v1003 = vsel %vm698, %v950, 0
        %v1006 = vsel %vm698, %v951, 0
        %v1009 = vsel %vm698, %v952, 0
        %v1012 = vsel %vm698, %v953, 0
        %v1015 = vsel %vm698, %v954, 0
        %v1018 = vsel %vm698, %v955, 0
        %1020 = vmatprep.subr.bf16.mxu0 0
        %1021 = vmatpush1.bf16.msra.mxu0 %v968
        %1022 = vmatprep.subr.bf16.mxu0 0
        %1023 = vmatpush1.bf16.msra.mxu0 %v969
        %1024 = vmatprep.subr.bf16.mxu0 0
        %1025 = vmatpush1.bf16.msra.mxu0 0
        %1026 = vmatprep.subr.bf16.mxu0 0
        %1027 = vmatpush1.bf16.msra.mxu0 0
        %1028 = vmatprep.subr.bf16.mxu0 0
        %1029 = vmatpush1.bf16.msra.mxu0 0
        %1030 = vmatprep.subr.bf16.mxu0 0
        %1031 = vmatpush1.bf16.msra.mxu0 0
        %1032 = vmatprep.subr.bf16.mxu0 0
        %1033 = vmatpush1.bf16.msra.mxu0 0
        %1034 = vmatprep.subr.bf16.mxu0 0
        %1035 = vmatpush1.bf16.msra.mxu0 0
        %1036 = vmatprep.subr.bf16.mxu0 0
        %1037 = vmatpush1.bf16.msra.mxu0 0
        %1038 = vmatprep.subr.bf16.mxu0 0
        %1039 = vmatpush1.bf16.msra.mxu0 0
        %1040 = vmatprep.subr.bf16.mxu0 0
        %1041 = vmatpush1.bf16.msra.mxu0 0
        %1042 = vmatprep.subr.bf16.mxu0 0
        %1043 = vmatpush1.bf16.msra.mxu0 0
        %1044 = vmatprep.subr.bf16.mxu0 0
        %1045 = vmatpush1.bf16.msra.mxu0 0
        %1046 = vmatprep.subr.bf16.mxu0 0
        %1047 = vmatpush1.bf16.msra.mxu0 0
        %1048 = vmatprep.subr.bf16.mxu0 0
        %1049 = vmatpush1.bf16.msra.mxu0 0
        %1050 = vmatprep.subr.bf16.mxu0 0
        %1051 = vmatpush1.bf16.msra.mxu0 0
        %1052 = vmatprep.mubr.bf16.mxu0 0
        %1053 = vmatmul.mubr.bf16.gmra.mrb[0].mxu0 %v973
        %v1054 = vpop.f32.mrb[0].mxu0
        %v1055 = vadd.f32 %v434, %v1054
        %v1056 = vpop.f32.mrb[0].mxu0
        %v1057 = vpop.f32.mrb[0].mxu0
        %v1058 = vadd.f32 %v438, %v1057
        %v1059 = vpop.f32.mrb[0].mxu0
        %1060 = vmatprep.mubr.bf16.mxu0 0
        %1061 = vmatmul.mubr.bf16.gmra.mrb[0].mxu0 %v976
        %v1062 = vpop.f32.mrb[0].mxu0
        %v1063 = vadd.f32 %v444, %v1062
        %v1064 = vpop.f32.mrb[0].mxu0
        %v1065 = vpop.f32.mrb[0].mxu0
        %v1066 = vadd.f32 %v448, %v1065
        %v1067 = vpop.f32.mrb[0].mxu0
        %1068 = vmatprep.mubr.bf16.mxu0 0
        %1069 = vmatmul.mubr.bf16.gmra.mrb[0].mxu0 %v979
        %v1070 = vpop.f32.mrb[0].mxu0
        %v1071 = vadd.f32 %v454, %v1070
        %v1072 = vpop.f32.mrb[0].mxu0
        %v1073 = vpop.f32.mrb[0].mxu0
        %v1074 = vadd.f32 %v458, %v1073
        %v1075 = vpop.f32.mrb[0].mxu0
        %1076 = vmatprep.mubr.bf16.mxu0 0
        %1077 = vmatmul.mubr.bf16.gmra.mrb[0].mxu0 %v982
        %v1078 = vpop.f32.mrb[0].mxu0
        %v1079 = vadd.f32 %v464, %v1078
        %v1080 = vpop.f32.mrb[0].mxu0
        %v1081 = vpop.f32.mrb[0].mxu0
        %v1082 = vadd.f32 %v468, %v1081
        %v1083 = vpop.f32.mrb[0].mxu0
        %1084 = vmatprep.mubr.bf16.mxu0 0
        %1085 = vmatmul.mubr.bf16.gmra.mrb[0].mxu0 %v985
        %v1086 = vpop.f32.mrb[0].mxu0
        %v1087 = vadd.f32 %v474, %v1086
        %v1088 = vpop.f32.mrb[0].mxu0
        %v1089 = vpop.f32.mrb[0].mxu0
        %v1090 = vadd.f32 %v478, %v1089
        %v1091 = vpop.f32.mrb[0].mxu0
        %1092 = vmatprep.mubr.bf16.mxu0 0
        %1093 = vmatmul.mubr.bf16.gmra.mrb[0].mxu0 %v988
        %v1094 = vpop.f32.mrb[0].mxu0
        %v1095 = vadd.f32 %v484, %v1094
        %v1096 = vpop.f32.mrb[0].mxu0
        %v1097 = vpop.f32.mrb[0].mxu0
        %v1098 = vadd.f32 %v488, %v1097
        %v1099 = vpop.f32.mrb[0].mxu0
        %1100 = vmatprep.mubr.bf16.mxu0 0
        %1101 = vmatmul.mubr.bf16.gmra.mrb[0].mxu0 %v991
        %v1102 = vpop.f32.mrb[0].mxu0
        %v1103 = vadd.f32 %v494, %v1102
        %v1104 = vpop.f32.mrb[0].mxu0
        %v1105 = vpop.f32.mrb[0].mxu0
        %v1106 = vadd.f32 %v498, %v1105
        %v1107 = vpop.f32.mrb[0].mxu0
        %1108 = vmatprep.mubr.bf16.mxu0 0
        %1109 = vmatmul.mubr.bf16.gmra.mrb[0].mxu0 %v994
        %v1110 = vpop.f32.mrb[0].mxu0
        %v1111 = vadd.f32 %v504, %v1110
        %v1112 = vpop.f32.mrb[0].mxu0
        %v1113 = vpop.f32.mrb[0].mxu0
        %v1114 = vadd.f32 %v508, %v1113
        %v1115 = vpop.f32.mrb[0].mxu0
        %1116 = vmatprep.mubr.bf16.mxu0 0
        %1117 = vmatmul.mubr.bf16.gmra.mrb[0].mxu0 %v997
        %v1118 = vpop.f32.mrb[0].mxu0
        %v1119 = vadd.f32 %v514, %v1118
        %v1120 = vpop.f32.mrb[0].mxu0
        %v1121 = vpop.f32.mrb[0].mxu0
        %v1122 = vadd.f32 %v518, %v1121
        %v1123 = vpop.f32.mrb[0].mxu0
        %1124 = vmatprep.mubr.bf16.mxu0 0
        %1125 = vmatmul.mubr.bf16.gmra.mrb[0].mxu0 %v1000
        %v1126 = vpop.f32.mrb[0].mxu0
        %v1127 = vadd.f32 %v524, %v1126
        %v1128 = vpop.f32.mrb[0].mxu0
        %v1129 = vpop.f32.mrb[0].mxu0
        %v1130 = vadd.f32 %v528, %v1129
        %v1131 = vpop.f32.mrb[0].mxu0
        %1132 = vmatprep.mubr.bf16.mxu0 0
        %1133 = vmatmul.mubr.bf16.gmra.mrb[0].mxu0 %v1003
        %v1134 = vpop.f32.mrb[0].mxu0
        %v1135 = vadd.f32 %v534, %v1134
        %v1136 = vpop.f32.mrb[0].mxu0
        %v1137 = vpop.f32.mrb[0].mxu0
        %v1138 = vadd.f32 %v538, %v1137
        %v1139 = vpop.f32.mrb[0].mxu0
        %1140 = vmatprep.mubr.bf16.mxu0 0
        %1141 = vmatmul.mubr.bf16.gmra.mrb[0].mxu0 %v1006
        %v1142 = vpop.f32.mrb[0].mxu0
        %v1143 = vadd.f32 %v544, %v1142
        %v1144 = vpop.f32.mrb[0].mxu0
        %v1145 = vpop.f32.mrb[0].mxu0
        %v1146 = vadd.f32 %v548, %v1145
        %v1147 = vpop.f32.mrb[0].mxu0
        %1148 = vmatprep.mubr.bf16.mxu0 0
        %1149 = vmatmul.mubr.bf16.gmra.mrb[0].mxu0 %v1009
        %v1150 = vpop.f32.mrb[0].mxu0
        %v1151 = vadd.f32 %v554, %v1150
        %v1152 = vpop.f32.mrb[0].mxu0
        %v1153 = vpop.f32.mrb[0].mxu0
        %v1154 = vadd.f32 %v558, %v1153
        %v1155 = vpop.f32.mrb[0].mxu0
        %1156 = vmatprep.mubr.bf16.mxu0 0
        %1157 = vmatmul.mubr.bf16.gmra.mrb[0].mxu0 %v1012
        %v1158 = vpop.f32.mrb[0].mxu0
        %v1159 = vadd.f32 %v564, %v1158
        %v1160 = vpop.f32.mrb[0].mxu0
        %v1161 = vpop.f32.mrb[0].mxu0
        %v1162 = vadd.f32 %v568, %v1161
        %v1163 = vpop.f32.mrb[0].mxu0
        %1164 = vmatprep.mubr.bf16.mxu0 0
        %1165 = vmatmul.mubr.bf16.gmra.mrb[0].mxu0 %v1015
        %v1166 = vpop.f32.mrb[0].mxu0
        %v1167 = vadd.f32 %v574, %v1166
        %v1168 = vpop.f32.mrb[0].mxu0
        %v1169 = vpop.f32.mrb[0].mxu0
        %v1170 = vadd.f32 %v578, %v1169
        %v1171 = vpop.f32.mrb[0].mxu0
        %1172 = vmatprep.mubr.bf16.mxu0 0
        %1173 = vmatmul.mubr.bf16.gmra.mrb[0].mxu0 %v1018
        %v1174 = vpop.f32.mrb[0].mxu0
        %v1175 = vadd.f32 %v584, %v1174
        %v1176 = vpop.f32.mrb[0].mxu0
        %v1177 = vpop.f32.mrb[0].mxu0
        %v1178 = vadd.f32 %v588, %v1177
        %v1179 = vpop.f32.mrb[0].mxu0
        %1180 = vdwg.mxu0
        %v1181 = vld [vmem:[%s5] sm:$0x1]
        %v1182 = vlaneseq
        %v1183 = vshrl.u32 %v1182, 7
        %v1184 = vsub.s32 0, %v1183
        %v1185 = vrot.slane %v1181, %v1184
        %v1186 = vmul.f32 %v1055, %v1185
        %v1187 = vmul.f32 %v1058, %v1185
        %v1188 = vmul.f32 %v1063, %v1185
        %v1189 = vmul.f32 %v1066, %v1185
        %v1190 = vmul.f32 %v1071, %v1185
        %v1191 = vmul.f32 %v1074, %v1185
        %v1192 = vmul.f32 %v1079, %v1185
        %v1193 = vmul.f32 %v1082, %v1185
        %v1194 = vmul.f32 %v1087, %v1185
        %v1195 = vmul.f32 %v1090, %v1185
        %v1196 = vmul.f32 %v1095, %v1185
        %v1197 = vmul.f32 %v1098, %v1185
        %v1198 = vmul.f32 %v1103, %v1185
        %v1199 = vmul.f32 %v1106, %v1185
        %v1200 = vmul.f32 %v1111, %v1185
        %v1201 = vmul.f32 %v1114, %v1185
        %v1202 = vmul.f32 %v1119, %v1185
        %v1203 = vmul.f32 %v1122, %v1185
        %v1204 = vmul.f32 %v1127, %v1185
        %v1205 = vmul.f32 %v1130, %v1185
        %v1206 = vmul.f32 %v1135, %v1185
        %v1207 = vmul.f32 %v1138, %v1185
        %v1208 = vmul.f32 %v1143, %v1185
        %v1209 = vmul.f32 %v1146, %v1185
        %v1210 = vmul.f32 %v1151, %v1185
        %v1211 = vmul.f32 %v1154, %v1185
        %v1212 = vmul.f32 %v1159, %v1185
        %v1213 = vmul.f32 %v1162, %v1185
        %v1214 = vmul.f32 %v1167, %v1185
        %v1215 = vmul.f32 %v1170, %v1185
        %v1216 = vmul.f32 %v1175, %v1185
        %v1217 = vmul.f32 %v1178, %v1185
        %v1218 = vld [vmem:[%s5 + $0x1] sm:$0x1]
        %v1219 = vlaneseq
        %v1220 = vshrl.u32 %v1219, 7
        %v1221 = vsub.s32 0, %v1220
        %v1222 = vrot.slane %v1218, %v1221
        %v1223 = vadd.f32 %v1186, %v1222
        %v1224 = vadd.f32 %v1187, %v1222
        %v1225 = vadd.f32 %v1188, %v1222
        %v1226 = vadd.f32 %v1189, %v1222
        %v1227 = vadd.f32 %v1190, %v1222
        %v1228 = vadd.f32 %v1191, %v1222
        %v1229 = vadd.f32 %v1192, %v1222
        %v1230 = vadd.f32 %v1193, %v1222
        %v1231 = vadd.f32 %v1194, %v1222
        %v1232 = vadd.f32 %v1195, %v1222
        %v1233 = vadd.f32 %v1196, %v1222
        %v1234 = vadd.f32 %v1197, %v1222
        %v1235 = vadd.f32 %v1198, %v1222
        %v1236 = vadd.f32 %v1199, %v1222
        %v1237 = vadd.f32 %v1200, %v1222
        %v1238 = vadd.f32 %v1201, %v1222
        %v1239 = vadd.f32 %v1202, %v1222
        %v1240 = vadd.f32 %v1203, %v1222
        %v1241 = vadd.f32 %v1204, %v1222
        %v1242 = vadd.f32 %v1205, %v1222
        %v1243 = vadd.f32 %v1206, %v1222
        %v1244 = vadd.f32 %v1207, %v1222
        %v1245 = vadd.f32 %v1208, %v1222
        %v1246 = vadd.f32 %v1209, %v1222
        %v1247 = vadd.f32 %v1210, %v1222
        %v1248 = vadd.f32 %v1211, %v1222
        %v1249 = vadd.f32 %v1212, %v1222
        %v1250 = vadd.f32 %v1213, %v1222
        %v1251 = vadd.f32 %v1214, %v1222
        %v1252 = vadd.f32 %v1215, %v1222
        %v1253 = vadd.f32 %v1216, %v1222
        %v1254 = vadd.f32 %v1217, %v1222
        %v1255 = vmax.f32 %v1223, 0.0
        %v1256 = vmax.f32 %v1224, 0.0
        %v1257 = vmax.f32 %v1225, 0.0
        %v1258 = vmax.f32 %v1226, 0.0
        %v1259 = vmax.f32 %v1227, 0.0
        %v1260 = vmax.f32 %v1228, 0.0
        %v1261 = vmax.f32 %v1229, 0.0
        %v1262 = vmax.f32 %v1230, 0.0
        %v1263 = vmax.f32 %v1231, 0.0
        %v1264 = vmax.f32 %v1232, 0.0
        %v1265 = vmax.f32 %v1233, 0.0
        %v1266 = vmax.f32 %v1234, 0.0
        %v1267 = vmax.f32 %v1235, 0.0
        %v1268 = vmax.f32 %v1236, 0.0
        %v1269 = vmax.f32 %v1237, 0.0
        %v1270 = vmax.f32 %v1238, 0.0
        %v1271 = vmax.f32 %v1239, 0.0
        %v1272 = vmax.f32 %v1240, 0.0
        %v1273 = vmax.f32 %v1241, 0.0
        %v1274 = vmax.f32 %v1242, 0.0
        %v1275 = vmax.f32 %v1243, 0.0
        %v1276 = vmax.f32 %v1244, 0.0
        %v1277 = vmax.f32 %v1245, 0.0
        %v1278 = vmax.f32 %v1246, 0.0
        %v1279 = vmax.f32 %v1247, 0.0
        %v1280 = vmax.f32 %v1248, 0.0
        %v1281 = vmax.f32 %v1249, 0.0
        %v1282 = vmax.f32 %v1250, 0.0
        %v1283 = vmax.f32 %v1251, 0.0
        %v1284 = vmax.f32 %v1252, 0.0
        %v1285 = vmax.f32 %v1253, 0.0
        %v1286 = vmax.f32 %v1254, 0.0
        %v1287 = vpack.c.bf16 %v1256, %v1255
        %v1288 = vpack.c.bf16 %v1258, %v1257
        %v1289 = vpack.c.bf16 %v1260, %v1259
        %v1290 = vpack.c.bf16 %v1262, %v1261
        %v1291 = vpack.c.bf16 %v1264, %v1263
        %v1292 = vpack.c.bf16 %v1266, %v1265
        %v1293 = vpack.c.bf16 %v1268, %v1267
        %v1294 = vpack.c.bf16 %v1270, %v1269
        %v1295 = vpack.c.bf16 %v1272, %v1271
        %v1296 = vpack.c.bf16 %v1274, %v1273
        %v1297 = vpack.c.bf16 %v1276, %v1275
        %v1298 = vpack.c.bf16 %v1278, %v1277
        %v1299 = vpack.c.bf16 %v1280, %v1279
        %v1300 = vpack.c.bf16 %v1282, %v1281
        %v1301 = vpack.c.bf16 %v1284, %v1283
        %v1302 = vpack.c.bf16 %v1286, %v1285
        %v1303 = vld [vmem:[%s2 + $0x10] sm:$0xf]
        %v1304 = vld [vmem:[%s2 + $0x14] sm:$0xf]
        %v1305 = vld [vmem:[%s2 + $0x18] sm:$0xf]
        %v1306 = vld [vmem:[%s2 + $0x1c] sm:$0xf]
        %v1307 = vld [vmem:[%s2 + $0x20] sm:$0xf]
        %v1308 = vld [vmem:[%s2 + $0x24] sm:$0xf]
        %v1309 = vld [vmem:[%s2 + $0x28] sm:$0xf]
        %v1310 = vld [vmem:[%s2 + $0x2c] sm:$0xf]
        %v1311 = vld [vmem:[%s2 + $0x30] sm:$0xf]
        %v1312 = vld [vmem:[%s2 + $0x34] sm:$0xf]
        %v1313 = vld [vmem:[%s2 + $0x38] sm:$0xf]
        %v1314 = vld [vmem:[%s2 + $0x3c] sm:$0xf]
        %v1315 = vld [vmem:[%s2 + $0x40] sm:$0xf]
        %v1316 = vld [vmem:[%s2 + $0x44] sm:$0xf]
        %v1317 = vld [vmem:[%s2 + $0x48] sm:$0xf]
        %v1318 = vld [vmem:[%s2 + $0x4c] sm:$0xf]
        %v1319 = vld [vmem:[%s4 + $0x2] sm:$0x1]
        %v1320 = vlaneseq
        %v1321 = vshrl.u32 %v1320, 7
        %v1322 = vsub.s32 0, %v1321
        %v1323 = vrot.slane %v1319, %v1322
        %v1340 = vunpack.c.l.b16 %v1303
        %v1341 = vunpack.c.l.b16 %v1304
        %v1342 = vunpack.c.l.b16 %v1305
        %v1343 = vunpack.c.l.b16 %v1306
        %v1344 = vunpack.c.l.b16 %v1307
        %v1345 = vunpack.c.l.b16 %v1308
        %v1346 = vunpack.c.l.b16 %v1309
        %v1347 = vunpack.c.l.b16 %v1310
        %v1348 = vunpack.c.l.b16 %v1311
        %v1349 = vunpack.c.l.b16 %v1312
        %v1350 = vunpack.c.l.b16 %v1313
        %v1351 = vunpack.c.l.b16 %v1314
        %v1352 = vunpack.c.l.b16 %v1315
        %v1353 = vunpack.c.l.b16 %v1316
        %v1354 = vunpack.c.l.b16 %v1317
        %v1355 = vunpack.c.l.b16 %v1318
        %v1356 = vpack.c.b16 %v1341, %v1340
        %v1357 = vpack.c.b16 %v1343, %v1342
        %v1358 = vpack.c.b16 %v1345, %v1344
        %v1359 = vpack.c.b16 %v1347, %v1346
        %v1360 = vpack.c.b16 %v1349, %v1348
        %v1361 = vpack.c.b16 %v1351, %v1350
        %v1362 = vpack.c.b16 %v1353, %v1352
        %v1363 = vpack.c.b16 %v1355, %v1354
        %1372 = vmatprep.subr.bf16.mxu0 0
        %1373 = vmatpush1.bf16.msra.mxu0 %v1356
        %1374 = vmatprep.subr.bf16.mxu0 0
        %1375 = vmatpush1.bf16.msra.mxu0 %v1357
        %1376 = vmatprep.subr.bf16.mxu0 0
        %1377 = vmatpush1.bf16.msra.mxu0 %v1358
        %1378 = vmatprep.subr.bf16.mxu0 0
        %1379 = vmatpush1.bf16.msra.mxu0 %v1359
        %1380 = vmatprep.subr.bf16.mxu0 0
        %1381 = vmatpush1.bf16.msra.mxu0 %v1360
        %1382 = vmatprep.subr.bf16.mxu0 0
        %1383 = vmatpush1.bf16.msra.mxu0 %v1361
        %1384 = vmatprep.subr.bf16.mxu0 0
        %1385 = vmatpush1.bf16.msra.mxu0 %v1362
        %1386 = vmatprep.subr.bf16.mxu0 0
        %1387 = vmatpush1.bf16.msra.mxu0 %v1363
        %1388 = vmatprep.subr.bf16.mxu0 0
        %1389 = vmatpush1.bf16.msra.mxu0 0
        %1390 = vmatprep.subr.bf16.mxu0 0
        %1391 = vmatpush1.bf16.msra.mxu0 0
        %1392 = vmatprep.subr.bf16.mxu0 0
        %1393 = vmatpush1.bf16.msra.mxu0 0
        %1394 = vmatprep.subr.bf16.mxu0 0
        %1395 = vmatpush1.bf16.msra.mxu0 0
        %1396 = vmatprep.subr.bf16.mxu0 0
        %1397 = vmatpush1.bf16.msra.mxu0 0
        %1398 = vmatprep.subr.bf16.mxu0 0
        %1399 = vmatpush1.bf16.msra.mxu0 0
        %1400 = vmatprep.subr.bf16.mxu0 0
        %1401 = vmatpush1.bf16.msra.mxu0 0
        %1402 = vmatprep.subr.bf16.mxu0 0
        %1403 = vmatpush1.bf16.msra.mxu0 0
        %1404 = vmatprep.mubr.bf16.mxu0 0
        %1405 = vmatmul.mubr.bf16.gmra.mrb[0].mxu0 %v1287
        %v1406 = vpop.f32.mrb[0].mxu0
        %v1407 = vadd.f32 %v1323, %v1406
        %v1408 = vpop.f32.mrb[0].mxu0
        %v1409 = vpop.f32.mrb[0].mxu0
        %v1410 = vadd.f32 %v1323, %v1409
        %v1411 = vpop.f32.mrb[0].mxu0
        %1412 = vmatprep.mubr.bf16.mxu0 0
        %1413 = vmatmul.mubr.bf16.gmra.mrb[0].mxu0 %v1288
        %v1414 = vpop.f32.mrb[0].mxu0
        %v1415 = vadd.f32 %v1323, %v1414
        %v1416 = vpop.f32.mrb[0].mxu0
        %v1417 = vpop.f32.mrb[0].mxu0
        %v1418 = vadd.f32 %v1323, %v1417
        %v1419 = vpop.f32.mrb[0].mxu0
        %1420 = vmatprep.mubr.bf16.mxu0 0
        %1421 = vmatmul.mubr.bf16.gmra.mrb[0].mxu0 %v1289
        %v1422 = vpop.f32.mrb[0].mxu0
        %v1423 = vadd.f32 %v1323, %v1422
        %v1424 = vpop.f32.mrb[0].mxu0
        %v1425 = vpop.f32.mrb[0].mxu0
        %v1426 = vadd.f32 %v1323, %v1425
        %v1427 = vpop.f32.mrb[0].mxu0
        %1428 = vmatprep.mubr.bf16.mxu0 0
        %1429 = vmatmul.mubr.bf16.gmra.mrb[0].mxu0 %v1290
        %v1430 = vpop.f32.mrb[0].mxu0
        %v1431 = vadd.f32 %v1323, %v1430
        %v1432 = vpop.f32.mrb[0].mxu0
        %v1433 = vpop.f32.mrb[0].mxu0
        %v1434 = vadd.f32 %v1323, %v1433
        %v1435 = vpop.f32.mrb[0].mxu0
        %1436 = vmatprep.mubr.bf16.mxu0 0
        %1437 = vmatmul.mubr.bf16.gmra.mrb[0].mxu0 %v1291
        %v1438 = vpop.f32.mrb[0].mxu0
        %v1439 = vadd.f32 %v1323, %v1438
        %v1440 = vpop.f32.mrb[0].mxu0
        %v1441 = vpop.f32.mrb[0].mxu0
        %v1442 = vadd.f32 %v1323, %v1441
        %v1443 = vpop.f32.mrb[0].mxu0
        %1444 = vmatprep.mubr.bf16.mxu0 0
        %1445 = vmatmul.mubr.bf16.gmra.mrb[0].mxu0 %v1292
        %v1446 = vpop.f32.mrb[0].mxu0
        %v1447 = vadd.f32 %v1323, %v1446
        %v1448 = vpop.f32.mrb[0].mxu0
        %v1449 = vpop.f32.mrb[0].mxu0
        %v1450 = vadd.f32 %v1323, %v1449
        %v1451 = vpop.f32.mrb[0].mxu0
        %1452 = vmatprep.mubr.bf16.mxu0 0
        %1453 = vmatmul.mubr.bf16.gmra.mrb[0].mxu0 %v1293
        %v1454 = vpop.f32.mrb[0].mxu0
        %v1455 = vadd.f32 %v1323, %v1454
        %v1456 = vpop.f32.mrb[0].mxu0
        %v1457 = vpop.f32.mrb[0].mxu0
        %v1458 = vadd.f32 %v1323, %v1457
        %v1459 = vpop.f32.mrb[0].mxu0
        %1460 = vmatprep.mubr.bf16.mxu0 0
        %1461 = vmatmul.mubr.bf16.gmra.mrb[0].mxu0 %v1294
        %v1462 = vpop.f32.mrb[0].mxu0
        %v1463 = vadd.f32 %v1323, %v1462
        %v1464 = vpop.f32.mrb[0].mxu0
        %v1465 = vpop.f32.mrb[0].mxu0
        %v1466 = vadd.f32 %v1323, %v1465
        %v1467 = vpop.f32.mrb[0].mxu0
        %1468 = vmatprep.mubr.bf16.mxu0 0
        %1469 = vmatmul.mubr.bf16.gmra.mrb[0].mxu0 %v1295
        %v1470 = vpop.f32.mrb[0].mxu0
        %v1471 = vadd.f32 %v1323, %v1470
        %v1472 = vpop.f32.mrb[0].mxu0
        %v1473 = vpop.f32.mrb[0].mxu0
        %v1474 = vadd.f32 %v1323, %v1473
        %v1475 = vpop.f32.mrb[0].mxu0
        %1476 = vmatprep.mubr.bf16.mxu0 0
        %1477 = vmatmul.mubr.bf16.gmra.mrb[0].mxu0 %v1296
        %v1478 = vpop.f32.mrb[0].mxu0
        %v1479 = vadd.f32 %v1323, %v1478
        %v1480 = vpop.f32.mrb[0].mxu0
        %v1481 = vpop.f32.mrb[0].mxu0
        %v1482 = vadd.f32 %v1323, %v1481
        %v1483 = vpop.f32.mrb[0].mxu0
        %1484 = vmatprep.mubr.bf16.mxu0 0
        %1485 = vmatmul.mubr.bf16.gmra.mrb[0].mxu0 %v1297
        %v1486 = vpop.f32.mrb[0].mxu0
        %v1487 = vadd.f32 %v1323, %v1486
        %v1488 = vpop.f32.mrb[0].mxu0
        %v1489 = vpop.f32.mrb[0].mxu0
        %v1490 = vadd.f32 %v1323, %v1489
        %v1491 = vpop.f32.mrb[0].mxu0
        %1492 = vmatprep.mubr.bf16.mxu0 0
        %1493 = vmatmul.mubr.bf16.gmra.mrb[0].mxu0 %v1298
        %v1494 = vpop.f32.mrb[0].mxu0
        %v1495 = vadd.f32 %v1323, %v1494
        %v1496 = vpop.f32.mrb[0].mxu0
        %v1497 = vpop.f32.mrb[0].mxu0
        %v1498 = vadd.f32 %v1323, %v1497
        %v1499 = vpop.f32.mrb[0].mxu0
        %1500 = vmatprep.mubr.bf16.mxu0 0
        %1501 = vmatmul.mubr.bf16.gmra.mrb[0].mxu0 %v1299
        %v1502 = vpop.f32.mrb[0].mxu0
        %v1503 = vadd.f32 %v1323, %v1502
        %v1504 = vpop.f32.mrb[0].mxu0
        %v1505 = vpop.f32.mrb[0].mxu0
        %v1506 = vadd.f32 %v1323, %v1505
        %v1507 = vpop.f32.mrb[0].mxu0
        %1508 = vmatprep.mubr.bf16.mxu0 0
        %1509 = vmatmul.mubr.bf16.gmra.mrb[0].mxu0 %v1300
        %v1510 = vpop.f32.mrb[0].mxu0
        %v1511 = vadd.f32 %v1323, %v1510
        %v1512 = vpop.f32.mrb[0].mxu0
        %v1513 = vpop.f32.mrb[0].mxu0
        %v1514 = vadd.f32 %v1323, %v1513
        %v1515 = vpop.f32.mrb[0].mxu0
        %1516 = vmatprep.mubr.bf16.mxu0 0
        %1517 = vmatmul.mubr.bf16.gmra.mrb[0].mxu0 %v1301
        %v1518 = vpop.f32.mrb[0].mxu0
        %v1519 = vadd.f32 %v1323, %v1518
        %v1520 = vpop.f32.mrb[0].mxu0
        %v1521 = vpop.f32.mrb[0].mxu0
        %v1522 = vadd.f32 %v1323, %v1521
        %v1523 = vpop.f32.mrb[0].mxu0
        %1524 = vmatprep.mubr.bf16.mxu0 0
        %1525 = vmatmul.mubr.bf16.gmra.mrb[0].mxu0 %v1302
        %v1526 = vpop.f32.mrb[0].mxu0
        %v1527 = vadd.f32 %v1323, %v1526
        %v1528 = vpop.f32.mrb[0].mxu0
        %v1529 = vpop.f32.mrb[0].mxu0
        %v1530 = vadd.f32 %v1323, %v1529
        %v1531 = vpop.f32.mrb[0].mxu0
        %1532 = vdwg.mxu0
        %v1533 = vmax.f32 %v1407, 0.0
        %v1534 = vmax.f32 %v1410, 0.0
        %v1535 = vmax.f32 %v1415, 0.0
        %v1536 = vmax.f32 %v1418, 0.0
        %v1537 = vmax.f32 %v1423, 0.0
        %v1538 = vmax.f32 %v1426, 0.0
        %v1539 = vmax.f32 %v1431, 0.0
        %v1540 = vmax.f32 %v1434, 0.0
        %v1541 = vmax.f32 %v1439, 0.0
        %v1542 = vmax.f32 %v1442, 0.0
        %v1543 = vmax.f32 %v1447, 0.0
        %v1544 = vmax.f32 %v1450, 0.0
        %v1545 = vmax.f32 %v1455, 0.0
        %v1546 = vmax.f32 %v1458, 0.0
        %v1547 = vmax.f32 %v1463, 0.0
        %v1548 = vmax.f32 %v1466, 0.0
        %v1549 = vmax.f32 %v1471, 0.0
        %v1550 = vmax.f32 %v1474, 0.0
        %v1551 = vmax.f32 %v1479, 0.0
        %v1552 = vmax.f32 %v1482, 0.0
        %v1553 = vmax.f32 %v1487, 0.0
        %v1554 = vmax.f32 %v1490, 0.0
        %v1555 = vmax.f32 %v1495, 0.0
        %v1556 = vmax.f32 %v1498, 0.0
        %v1557 = vmax.f32 %v1503, 0.0
        %v1558 = vmax.f32 %v1506, 0.0
        %v1559 = vmax.f32 %v1511, 0.0
        %v1560 = vmax.f32 %v1514, 0.0
        %v1561 = vmax.f32 %v1519, 0.0
        %v1562 = vmax.f32 %v1522, 0.0
        %v1563 = vmax.f32 %v1527, 0.0
        %v1564 = vmax.f32 %v1530, 0.0
        %v1565 = vpack.c.bf16 %v1534, %v1533
        %v1566 = vpack.c.bf16 %v1536, %v1535
        %v1567 = vpack.c.bf16 %v1538, %v1537
        %v1568 = vpack.c.bf16 %v1540, %v1539
        %v1569 = vpack.c.bf16 %v1542, %v1541
        %v1570 = vpack.c.bf16 %v1544, %v1543
        %v1571 = vpack.c.bf16 %v1546, %v1545
        %v1572 = vpack.c.bf16 %v1548, %v1547
        %v1573 = vpack.c.bf16 %v1550, %v1549
        %v1574 = vpack.c.bf16 %v1552, %v1551
        %v1575 = vpack.c.bf16 %v1554, %v1553
        %v1576 = vpack.c.bf16 %v1556, %v1555
        %v1577 = vpack.c.bf16 %v1558, %v1557
        %v1578 = vpack.c.bf16 %v1560, %v1559
        %v1579 = vpack.c.bf16 %v1562, %v1561
        %v1580 = vpack.c.bf16 %v1564, %v1563
        %v1581 = vld [vmem:[%s2 + $0x50] sm:$0xf]
        %v1582 = vld [vmem:[%s2 + $0x54] sm:$0xf]
        %v1583 = vld [vmem:[%s2 + $0x58] sm:$0xf]
        %v1584 = vld [vmem:[%s2 + $0x5c] sm:$0xf]
        %v1585 = vld [vmem:[%s4 + $0x3] sm:$0x1]
        %v1586 = vlaneseq
        %v1587 = vshrl.u32 %v1586, 7
        %v1588 = vsub.s32 0, %v1587
        %v1589 = vrot.slane %v1585, %v1588
        %v1594 = vunpack.c.l.b16 %v1581
        %v1595 = vunpack.c.l.b16 %v1582
        %v1596 = vunpack.c.l.b16 %v1583
        %v1597 = vunpack.c.l.b16 %v1584
        %v1598 = vpack.c.b16 %v1595, %v1594
        %v1599 = vpack.c.b16 %v1597, %v1596
        %v1603 = vsel %vm698, %v1565, 0
        %v1606 = vsel %vm698, %v1566, 0
        %v1609 = vsel %vm698, %v1567, 0
        %v1612 = vsel %vm698, %v1568, 0
        %v1615 = vsel %vm698, %v1569, 0
        %v1618 = vsel %vm698, %v1570, 0
        %v1621 = vsel %vm698, %v1571, 0
        %v1624 = vsel %vm698, %v1572, 0
        %v1627 = vsel %vm698, %v1573, 0
        %v1630 = vsel %vm698, %v1574, 0
        %v1633 = vsel %vm698, %v1575, 0
        %v1636 = vsel %vm698, %v1576, 0
        %v1639 = vsel %vm698, %v1577, 0
        %v1642 = vsel %vm698, %v1578, 0
        %v1645 = vsel %vm698, %v1579, 0
        %v1648 = vsel %vm698, %v1580, 0
        %1650 = vmatprep.subr.bf16.mxu0 0
        %1651 = vmatpush1.bf16.msra.mxu0 %v1598
        %1652 = vmatprep.subr.bf16.mxu0 0
        %1653 = vmatpush1.bf16.msra.mxu0 %v1599
        %1654 = vmatprep.subr.bf16.mxu0 0
        %1655 = vmatpush1.bf16.msra.mxu0 0
        %1656 = vmatprep.subr.bf16.mxu0 0
        %1657 = vmatpush1.bf16.msra.mxu0 0
        %1658 = vmatprep.subr.bf16.mxu0 0
        %1659 = vmatpush1.bf16.msra.mxu0 0
        %1660 = vmatprep.subr.bf16.mxu0 0
        %1661 = vmatpush1.bf16.msra.mxu0 0
        %1662 = vmatprep.subr.bf16.mxu0 0
        %1663 = vmatpush1.bf16.msra.mxu0 0
        %1664 = vmatprep.subr.bf16.mxu0 0
        %1665 = vmatpush1.bf16.msra.mxu0 0
        %1666 = vmatprep.subr.bf16.mxu0 0
        %1667 = vmatpush1.bf16.msra.mxu0 0
        %1668 = vmatprep.subr.bf16.mxu0 0
        %1669 = vmatpush1.bf16.msra.mxu0 0
        %1670 = vmatprep.subr.bf16.mxu0 0
        %1671 = vmatpush1.bf16.msra.mxu0 0
        %1672 = vmatprep.subr.bf16.mxu0 0
        %1673 = vmatpush1.bf16.msra.mxu0 0
        %1674 = vmatprep.subr.bf16.mxu0 0
        %1675 = vmatpush1.bf16.msra.mxu0 0
        %1676 = vmatprep.subr.bf16.mxu0 0
        %1677 = vmatpush1.bf16.msra.mxu0 0
        %1678 = vmatprep.subr.bf16.mxu0 0
        %1679 = vmatpush1.bf16.msra.mxu0 0
        %1680 = vmatprep.subr.bf16.mxu0 0
        %1681 = vmatpush1.bf16.msra.mxu0 0
        %1682 = vmatprep.mubr.bf16.mxu0 0
        %1683 = vmatmul.mubr.bf16.gmra.mrb[0].mxu0 %v1603
        %v1684 = vpop.f32.mrb[0].mxu0
        %v1685 = vadd.f32 %v1589, %v1684
        %v1686 = vpop.f32.mrb[0].mxu0
        %v1687 = vpop.f32.mrb[0].mxu0
        %v1688 = vadd.f32 %v1589, %v1687
        %v1689 = vpop.f32.mrb[0].mxu0
        %1690 = vmatprep.mubr.bf16.mxu0 0
        %1691 = vmatmul.mubr.bf16.gmra.mrb[0].mxu0 %v1606
        %v1692 = vpop.f32.mrb[0].mxu0
        %v1693 = vadd.f32 %v1589, %v1692
        %v1694 = vpop.f32.mrb[0].mxu0
        %v1695 = vpop.f32.mrb[0].mxu0
        %v1696 = vadd.f32 %v1589, %v1695
        %v1697 = vpop.f32.mrb[0].mxu0
        %1698 = vmatprep.mubr.bf16.mxu0 0
        %1699 = vmatmul.mubr.bf16.gmra.mrb[0].mxu0 %v1609
        %v1700 = vpop.f32.mrb[0].mxu0
        %v1701 = vadd.f32 %v1589, %v1700
        %v1702 = vpop.f32.mrb[0].mxu0
        %v1703 = vpop.f32.mrb[0].mxu0
        %v1704 = vadd.f32 %v1589, %v1703
        %v1705 = vpop.f32.mrb[0].mxu0
        %1706 = vmatprep.mubr.bf16.mxu0 0
        %1707 = vmatmul.mubr.bf16.gmra.mrb[0].mxu0 %v1612
        %v1708 = vpop.f32.mrb[0].mxu0
        %v1709 = vadd.f32 %v1589, %v1708
        %v1710 = vpop.f32.mrb[0].mxu0
        %v1711 = vpop.f32.mrb[0].mxu0
        %v1712 = vadd.f32 %v1589, %v1711
        %v1713 = vpop.f32.mrb[0].mxu0
        %1714 = vmatprep.mubr.bf16.mxu0 0
        %1715 = vmatmul.mubr.bf16.gmra.mrb[0].mxu0 %v1615
        %v1716 = vpop.f32.mrb[0].mxu0
        %v1717 = vadd.f32 %v1589, %v1716
        %v1718 = vpop.f32.mrb[0].mxu0
        %v1719 = vpop.f32.mrb[0].mxu0
        %v1720 = vadd.f32 %v1589, %v1719
        %v1721 = vpop.f32.mrb[0].mxu0
        %1722 = vmatprep.mubr.bf16.mxu0 0
        %1723 = vmatmul.mubr.bf16.gmra.mrb[0].mxu0 %v1618
        %v1724 = vpop.f32.mrb[0].mxu0
        %v1725 = vadd.f32 %v1589, %v1724
        %v1726 = vpop.f32.mrb[0].mxu0
        %v1727 = vpop.f32.mrb[0].mxu0
        %v1728 = vadd.f32 %v1589, %v1727
        %v1729 = vpop.f32.mrb[0].mxu0
        %1730 = vmatprep.mubr.bf16.mxu0 0
        %1731 = vmatmul.mubr.bf16.gmra.mrb[0].mxu0 %v1621
        %v1732 = vpop.f32.mrb[0].mxu0
        %v1733 = vadd.f32 %v1589, %v1732
        %v1734 = vpop.f32.mrb[0].mxu0
        %v1735 = vpop.f32.mrb[0].mxu0
        %v1736 = vadd.f32 %v1589, %v1735
        %v1737 = vpop.f32.mrb[0].mxu0
        %1738 = vmatprep.mubr.bf16.mxu0 0
        %1739 = vmatmul.mubr.bf16.gmra.mrb[0].mxu0 %v1624
        %v1740 = vpop.f32.mrb[0].mxu0
        %v1741 = vadd.f32 %v1589, %v1740
        %v1742 = vpop.f32.mrb[0].mxu0
        %v1743 = vpop.f32.mrb[0].mxu0
        %v1744 = vadd.f32 %v1589, %v1743
        %v1745 = vpop.f32.mrb[0].mxu0
        %1746 = vmatprep.mubr.bf16.mxu0 0
        %1747 = vmatmul.mubr.bf16.gmra.mrb[0].mxu0 %v1627
        %v1748 = vpop.f32.mrb[0].mxu0
        %v1749 = vadd.f32 %v1589, %v1748
        %v1750 = vpop.f32.mrb[0].mxu0
        %v1751 = vpop.f32.mrb[0].mxu0
        %v1752 = vadd.f32 %v1589, %v1751
        %v1753 = vpop.f32.mrb[0].mxu0
        %1754 = vmatprep.mubr.bf16.mxu0 0
        %1755 = vmatmul.mubr.bf16.gmra.mrb[0].mxu0 %v1630
        %v1756 = vpop.f32.mrb[0].mxu0
        %v1757 = vadd.f32 %v1589, %v1756
        %v1758 = vpop.f32.mrb[0].mxu0
        %v1759 = vpop.f32.mrb[0].mxu0
        %v1760 = vadd.f32 %v1589, %v1759
        %v1761 = vpop.f32.mrb[0].mxu0
        %1762 = vmatprep.mubr.bf16.mxu0 0
        %1763 = vmatmul.mubr.bf16.gmra.mrb[0].mxu0 %v1633
        %v1764 = vpop.f32.mrb[0].mxu0
        %v1765 = vadd.f32 %v1589, %v1764
        %v1766 = vpop.f32.mrb[0].mxu0
        %v1767 = vpop.f32.mrb[0].mxu0
        %v1768 = vadd.f32 %v1589, %v1767
        %v1769 = vpop.f32.mrb[0].mxu0
        %1770 = vmatprep.mubr.bf16.mxu0 0
        %1771 = vmatmul.mubr.bf16.gmra.mrb[0].mxu0 %v1636
        %v1772 = vpop.f32.mrb[0].mxu0
        %v1773 = vadd.f32 %v1589, %v1772
        %v1774 = vpop.f32.mrb[0].mxu0
        %v1775 = vpop.f32.mrb[0].mxu0
        %v1776 = vadd.f32 %v1589, %v1775
        %v1777 = vpop.f32.mrb[0].mxu0
        %1778 = vmatprep.mubr.bf16.mxu0 0
        %1779 = vmatmul.mubr.bf16.gmra.mrb[0].mxu0 %v1639
        %v1780 = vpop.f32.mrb[0].mxu0
        %v1781 = vadd.f32 %v1589, %v1780
        %v1782 = vpop.f32.mrb[0].mxu0
        %v1783 = vpop.f32.mrb[0].mxu0
        %v1784 = vadd.f32 %v1589, %v1783
        %v1785 = vpop.f32.mrb[0].mxu0
        %1786 = vmatprep.mubr.bf16.mxu0 0
        %1787 = vmatmul.mubr.bf16.gmra.mrb[0].mxu0 %v1642
        %v1788 = vpop.f32.mrb[0].mxu0
        %v1789 = vadd.f32 %v1589, %v1788
        %v1790 = vpop.f32.mrb[0].mxu0
        %v1791 = vpop.f32.mrb[0].mxu0
        %v1792 = vadd.f32 %v1589, %v1791
        %v1793 = vpop.f32.mrb[0].mxu0
        %1794 = vmatprep.mubr.bf16.mxu0 0
        %1795 = vmatmul.mubr.bf16.gmra.mrb[0].mxu0 %v1645
        %v1796 = vpop.f32.mrb[0].mxu0
        %v1797 = vadd.f32 %v1589, %v1796
        %v1798 = vpop.f32.mrb[0].mxu0
        %v1799 = vpop.f32.mrb[0].mxu0
        %v1800 = vadd.f32 %v1589, %v1799
        %v1801 = vpop.f32.mrb[0].mxu0
        %1802 = vmatprep.mubr.bf16.mxu0 0
        %1803 = vmatmul.mubr.bf16.gmra.mrb[0].mxu0 %v1648
        %v1804 = vpop.f32.mrb[0].mxu0
        %v1805 = vadd.f32 %v1589, %v1804
        %v1806 = vpop.f32.mrb[0].mxu0
        %v1807 = vpop.f32.mrb[0].mxu0
        %v1808 = vadd.f32 %v1589, %v1807
        %v1809 = vpop.f32.mrb[0].mxu0
        %1810 = vdwg.mxu0
        %v1811 = vmax.f32 %v1685, 0.0
        %v1812 = vmax.f32 %v1688, 0.0
        %v1813 = vmax.f32 %v1693, 0.0
        %v1814 = vmax.f32 %v1696, 0.0
        %v1815 = vmax.f32 %v1701, 0.0
        %v1816 = vmax.f32 %v1704, 0.0
        %v1817 = vmax.f32 %v1709, 0.0
        %v1818 = vmax.f32 %v1712, 0.0
        %v1819 = vmax.f32 %v1717, 0.0
        %v1820 = vmax.f32 %v1720, 0.0
        %v1821 = vmax.f32 %v1725, 0.0
        %v1822 = vmax.f32 %v1728, 0.0
        %v1823 = vmax.f32 %v1733, 0.0
        %v1824 = vmax.f32 %v1736, 0.0
        %v1825 = vmax.f32 %v1741, 0.0
        %v1826 = vmax.f32 %v1744, 0.0
        %v1827 = vmax.f32 %v1749, 0.0
        %v1828 = vmax.f32 %v1752, 0.0
        %v1829 = vmax.f32 %v1757, 0.0
        %v1830 = vmax.f32 %v1760, 0.0
        %v1831 = vmax.f32 %v1765, 0.0
        %v1832 = vmax.f32 %v1768, 0.0
        %v1833 = vmax.f32 %v1773, 0.0
        %v1834 = vmax.f32 %v1776, 0.0
        %v1835 = vmax.f32 %v1781, 0.0
        %v1836 = vmax.f32 %v1784, 0.0
        %v1837 = vmax.f32 %v1789, 0.0
        %v1838 = vmax.f32 %v1792, 0.0
        %v1839 = vmax.f32 %v1797, 0.0
        %v1840 = vmax.f32 %v1800, 0.0
        %v1841 = vmax.f32 %v1805, 0.0
        %v1842 = vmax.f32 %v1808, 0.0
        %v1843 = vpack.c.bf16 %v1812, %v1811
        %v1844 = vpack.c.bf16 %v1814, %v1813
        %v1845 = vpack.c.bf16 %v1816, %v1815
        %v1846 = vpack.c.bf16 %v1818, %v1817
        %v1847 = vpack.c.bf16 %v1820, %v1819
        %v1848 = vpack.c.bf16 %v1822, %v1821
        %v1849 = vpack.c.bf16 %v1824, %v1823
        %v1850 = vpack.c.bf16 %v1826, %v1825
        %v1851 = vpack.c.bf16 %v1828, %v1827
        %v1852 = vpack.c.bf16 %v1830, %v1829
        %v1853 = vpack.c.bf16 %v1832, %v1831
        %v1854 = vpack.c.bf16 %v1834, %v1833
        %v1855 = vpack.c.bf16 %v1836, %v1835
        %v1856 = vpack.c.bf16 %v1838, %v1837
        %v1857 = vpack.c.bf16 %v1840, %v1839
        %v1858 = vpack.c.bf16 %v1842, %v1841
        %v1859 = vld [vmem:[%s3 + $0x10] sm:$0xf]
        %v1860 = vld [vmem:[%s3 + $0x14] sm:$0xf]
        %v1861 = vld [vmem:[%s3 + $0x18] sm:$0xf]
        %v1862 = vld [vmem:[%s3 + $0x1c] sm:$0xf]
        %v1867 = vunpack.c.l.b16 %v1859
        %v1868 = vunpack.c.l.b16 %v1860
        %v1869 = vunpack.c.l.b16 %v1861
        %v1870 = vunpack.c.l.b16 %v1862
        %v1871 = vpack.c.b16 %v1868, %v1867
        %v1872 = vpack.c.b16 %v1870, %v1869
        %v1876 = vsel %vm698, %v1843, 0
        %v1879 = vsel %vm698, %v1844, 0
        %v1882 = vsel %vm698, %v1845, 0
        %v1885 = vsel %vm698, %v1846, 0
        %v1888 = vsel %vm698, %v1847, 0
        %v1891 = vsel %vm698, %v1848, 0
        %v1894 = vsel %vm698, %v1849, 0
        %v1897 = vsel %vm698, %v1850, 0
        %v1900 = vsel %vm698, %v1851, 0
        %v1903 = vsel %vm698, %v1852, 0
        %v1906 = vsel %vm698, %v1853, 0
        %v1909 = vsel %vm698, %v1854, 0
        %v1912 = vsel %vm698, %v1855, 0
        %v1915 = vsel %vm698, %v1856, 0
        %v1918 = vsel %vm698, %v1857, 0
        %v1921 = vsel %vm698, %v1858, 0
        %1923 = vmatprep.subr.bf16.mxu0 0
        %1924 = vmatpush1.bf16.msra.mxu0 %v1871
        %1925 = vmatprep.subr.bf16.mxu0 0
        %1926 = vmatpush1.bf16.msra.mxu0 %v1872
        %1927 = vmatprep.subr.bf16.mxu0 0
        %1928 = vmatpush1.bf16.msra.mxu0 0
        %1929 = vmatprep.subr.bf16.mxu0 0
        %1930 = vmatpush1.bf16.msra.mxu0 0
        %1931 = vmatprep.subr.bf16.mxu0 0
        %1932 = vmatpush1.bf16.msra.mxu0 0
        %1933 = vmatprep.subr.bf16.mxu0 0
        %1934 = vmatpush1.bf16.msra.mxu0 0
        %1935 = vmatprep.subr.bf16.mxu0 0
        %1936 = vmatpush1.bf16.msra.mxu0 0
        %1937 = vmatprep.subr.bf16.mxu0 0
        %1938 = vmatpush1.bf16.msra.mxu0 0
        %1939 = vmatprep.subr.bf16.mxu0 0
        %1940 = vmatpush1.bf16.msra.mxu0 0
        %1941 = vmatprep.subr.bf16.mxu0 0
        %1942 = vmatpush1.bf16.msra.mxu0 0
        %1943 = vmatprep.subr.bf16.mxu0 0
        %1944 = vmatpush1.bf16.msra.mxu0 0
        %1945 = vmatprep.subr.bf16.mxu0 0
        %1946 = vmatpush1.bf16.msra.mxu0 0
        %1947 = vmatprep.subr.bf16.mxu0 0
        %1948 = vmatpush1.bf16.msra.mxu0 0
        %1949 = vmatprep.subr.bf16.mxu0 0
        %1950 = vmatpush1.bf16.msra.mxu0 0
        %1951 = vmatprep.subr.bf16.mxu0 0
        %1952 = vmatpush1.bf16.msra.mxu0 0
        %1953 = vmatprep.subr.bf16.mxu0 0
        %1954 = vmatpush1.bf16.msra.mxu0 0
        %1955 = vmatprep.mubr.bf16.mxu0 0
        %1956 = vmatmul.mubr.bf16.gmra.mrb[0].mxu0 %v1876
        %v1957 = vpop.f32.mrb[0].mxu0
        %v1958 = vadd.f32 %v1055, %v1957
        %v1959 = vpop.f32.mrb[0].mxu0
        %v1960 = vpop.f32.mrb[0].mxu0
        %v1961 = vadd.f32 %v1058, %v1960
        %v1962 = vpop.f32.mrb[0].mxu0
        %1963 = vmatprep.mubr.bf16.mxu0 0
        %1964 = vmatmul.mubr.bf16.gmra.mrb[0].mxu0 %v1879
        %v1965 = vpop.f32.mrb[0].mxu0
        %v1966 = vadd.f32 %v1063, %v1965
        %v1967 = vpop.f32.mrb[0].mxu0
        %v1968 = vpop.f32.mrb[0].mxu0
        %v1969 = vadd.f32 %v1066, %v1968
        %v1970 = vpop.f32.mrb[0].mxu0
        %1971 = vmatprep.mubr.bf16.mxu0 0
        %1972 = vmatmul.mubr.bf16.gmra.mrb[0].mxu0 %v1882
        %v1973 = vpop.f32.mrb[0].mxu0
        %v1974 = vadd.f32 %v1071, %v1973
        %v1975 = vpop.f32.mrb[0].mxu0
        %v1976 = vpop.f32.mrb[0].mxu0
        %v1977 = vadd.f32 %v1074, %v1976
        %v1978 = vpop.f32.mrb[0].mxu0
        %1979 = vmatprep.mubr.bf16.mxu0 0
        %1980 = vmatmul.mubr.bf16.gmra.mrb[0].mxu0 %v1885
        %v1981 = vpop.f32.mrb[0].mxu0
        %v1982 = vadd.f32 %v1079, %v1981
        %v1983 = vpop.f32.mrb[0].mxu0
        %v1984 = vpop.f32.mrb[0].mxu0
        %v1985 = vadd.f32 %v1082, %v1984
        %v1986 = vpop.f32.mrb[0].mxu0
        %1987 = vmatprep.mubr.bf16.mxu0 0
        %1988 = vmatmul.mubr.bf16.gmra.mrb[0].mxu0 %v1888
        %v1989 = vpop.f32.mrb[0].mxu0
        %v1990 = vadd.f32 %v1087, %v1989
        %v1991 = vpop.f32.mrb[0].mxu0
        %v1992 = vpop.f32.mrb[0].mxu0
        %v1993 = vadd.f32 %v1090, %v1992
        %v1994 = vpop.f32.mrb[0].mxu0
        %1995 = vmatprep.mubr.bf16.mxu0 0
        %1996 = vmatmul.mubr.bf16.gmra.mrb[0].mxu0 %v1891
        %v1997 = vpop.f32.mrb[0].mxu0
        %v1998 = vadd.f32 %v1095, %v1997
        %v1999 = vpop.f32.mrb[0].mxu0
        %v2000 = vpop.f32.mrb[0].mxu0
        %v2001 = vadd.f32 %v1098, %v2000
        %v2002 = vpop.f32.mrb[0].mxu0
        %2003 = vmatprep.mubr.bf16.mxu0 0
        %2004 = vmatmul.mubr.bf16.gmra.mrb[0].mxu0 %v1894
        %v2005 = vpop.f32.mrb[0].mxu0
        %v2006 = vadd.f32 %v1103, %v2005
        %v2007 = vpop.f32.mrb[0].mxu0
        %v2008 = vpop.f32.mrb[0].mxu0
        %v2009 = vadd.f32 %v1106, %v2008
        %v2010 = vpop.f32.mrb[0].mxu0
        %2011 = vmatprep.mubr.bf16.mxu0 0
        %2012 = vmatmul.mubr.bf16.gmra.mrb[0].mxu0 %v1897
        %v2013 = vpop.f32.mrb[0].mxu0
        %v2014 = vadd.f32 %v1111, %v2013
        %v2015 = vpop.f32.mrb[0].mxu0
        %v2016 = vpop.f32.mrb[0].mxu0
        %v2017 = vadd.f32 %v1114, %v2016
        %v2018 = vpop.f32.mrb[0].mxu0
        %2019 = vmatprep.mubr.bf16.mxu0 0
        %2020 = vmatmul.mubr.bf16.gmra.mrb[0].mxu0 %v1900
        %v2021 = vpop.f32.mrb[0].mxu0
        %v2022 = vadd.f32 %v1119, %v2021
        %v2023 = vpop.f32.mrb[0].mxu0
        %v2024 = vpop.f32.mrb[0].mxu0
        %v2025 = vadd.f32 %v1122, %v2024
        %v2026 = vpop.f32.mrb[0].mxu0
        %2027 = vmatprep.mubr.bf16.mxu0 0
        %2028 = vmatmul.mubr.bf16.gmra.mrb[0].mxu0 %v1903
        %v2029 = vpop.f32.mrb[0].mxu0
        %v2030 = vadd.f32 %v1127, %v2029
        %v2031 = vpop.f32.mrb[0].mxu0
        %v2032 = vpop.f32.mrb[0].mxu0
        %v2033 = vadd.f32 %v1130, %v2032
        %v2034 = vpop.f32.mrb[0].mxu0
        %2035 = vmatprep.mubr.bf16.mxu0 0
        %2036 = vmatmul.mubr.bf16.gmra.mrb[0].mxu0 %v1906
        %v2037 = vpop.f32.mrb[0].mxu0
        %v2038 = vadd.f32 %v1135, %v2037
        %v2039 = vpop.f32.mrb[0].mxu0
        %v2040 = vpop.f32.mrb[0].mxu0
        %v2041 = vadd.f32 %v1138, %v2040
        %v2042 = vpop.f32.mrb[0].mxu0
        %2043 = vmatprep.mubr.bf16.mxu0 0
        %2044 = vmatmul.mubr.bf16.gmra.mrb[0].mxu0 %v1909
        %v2045 = vpop.f32.mrb[0].mxu0
        %v2046 = vadd.f32 %v1143, %v2045
        %v2047 = vpop.f32.mrb[0].mxu0
        %v2048 = vpop.f32.mrb[0].mxu0
        %v2049 = vadd.f32 %v1146, %v2048
        %v2050 = vpop.f32.mrb[0].mxu0
        %2051 = vmatprep.mubr.bf16.mxu0 0
        %2052 = vmatmul.mubr.bf16.gmra.mrb[0].mxu0 %v1912
        %v2053 = vpop.f32.mrb[0].mxu0
        %v2054 = vadd.f32 %v1151, %v2053
        %v2055 = vpop.f32.mrb[0].mxu0
        %v2056 = vpop.f32.mrb[0].mxu0
        %v2057 = vadd.f32 %v1154, %v2056
        %v2058 = vpop.f32.mrb[0].mxu0
        %2059 = vmatprep.mubr.bf16.mxu0 0
        %2060 = vmatmul.mubr.bf16.gmra.mrb[0].mxu0 %v1915
        %v2061 = vpop.f32.mrb[0].mxu0
        %v2062 = vadd.f32 %v1159, %v2061
        %v2063 = vpop.f32.mrb[0].mxu0
        %v2064 = vpop.f32.mrb[0].mxu0
        %v2065 = vadd.f32 %v1162, %v2064
        %v2066 = vpop.f32.mrb[0].mxu0
        %2067 = vmatprep.mubr.bf16.mxu0 0
        %2068 = vmatmul.mubr.bf16.gmra.mrb[0].mxu0 %v1918
        %v2069 = vpop.f32.mrb[0].mxu0
        %v2070 = vadd.f32 %v1167, %v2069
        %v2071 = vpop.f32.mrb[0].mxu0
        %v2072 = vpop.f32.mrb[0].mxu0
        %v2073 = vadd.f32 %v1170, %v2072
        %v2074 = vpop.f32.mrb[0].mxu0
        %2075 = vmatprep.mubr.bf16.mxu0 0
        %2076 = vmatmul.mubr.bf16.gmra.mrb[0].mxu0 %v1921
        %v2077 = vpop.f32.mrb[0].mxu0
        %v2078 = vadd.f32 %v1175, %v2077
        %v2079 = vpop.f32.mrb[0].mxu0
        %v2080 = vpop.f32.mrb[0].mxu0
        %v2081 = vadd.f32 %v1178, %v2080
        %v2082 = vpop.f32.mrb[0].mxu0
        %2083 = vdwg.mxu0
        %v2084 = vld [vmem:[%s5 + $0x2] sm:$0x1]
        %v2085 = vld [vmem:[%s5 + $0x3] sm:$0x1]
        %v2086 = vlaneseq
        %v2087 = vshrl.u32 %v2086, 7
        %v2088 = vsub.s32 0, %v2087
        %v2089 = vrot.slane %v2084, %v2088
        %v2090 = vmul.f32 %v1958, %v2089
        %v2091 = vmul.f32 %v1961, %v2089
        %v2092 = vmul.f32 %v1966, %v2089
        %v2093 = vmul.f32 %v1969, %v2089
        %v2094 = vmul.f32 %v1974, %v2089
        %v2095 = vmul.f32 %v1977, %v2089
        %v2096 = vmul.f32 %v1982, %v2089
        %v2097 = vmul.f32 %v1985, %v2089
        %v2098 = vmul.f32 %v1990, %v2089
        %v2099 = vmul.f32 %v1993, %v2089
        %v2100 = vmul.f32 %v1998, %v2089
        %v2101 = vmul.f32 %v2001, %v2089
        %v2102 = vmul.f32 %v2006, %v2089
        %v2103 = vmul.f32 %v2009, %v2089
        %v2104 = vmul.f32 %v2014, %v2089
        %v2105 = vmul.f32 %v2017, %v2089
        %v2106 = vmul.f32 %v2022, %v2089
        %v2107 = vmul.f32 %v2025, %v2089
        %v2108 = vmul.f32 %v2030, %v2089
        %v2109 = vmul.f32 %v2033, %v2089
        %v2110 = vmul.f32 %v2038, %v2089
        %v2111 = vmul.f32 %v2041, %v2089
        %v2112 = vmul.f32 %v2046, %v2089
        %v2113 = vmul.f32 %v2049, %v2089
        %v2114 = vmul.f32 %v2054, %v2089
        %v2115 = vmul.f32 %v2057, %v2089
        %v2116 = vmul.f32 %v2062, %v2089
        %v2117 = vmul.f32 %v2065, %v2089
        %v2118 = vmul.f32 %v2070, %v2089
        %v2119 = vmul.f32 %v2073, %v2089
        %v2120 = vmul.f32 %v2078, %v2089
        %v2121 = vmul.f32 %v2081, %v2089
        %v2122 = vlaneseq
        %v2123 = vshrl.u32 %v2122, 7
        %v2124 = vsub.s32 0, %v2123
        %v2125 = vrot.slane %v2085, %v2124
        %v2126 = vadd.f32 %v2090, %v2125
        %v2127 = vadd.f32 %v2091, %v2125
        %v2128 = vadd.f32 %v2092, %v2125
        %v2129 = vadd.f32 %v2093, %v2125
        %v2130 = vadd.f32 %v2094, %v2125
        %v2131 = vadd.f32 %v2095, %v2125
        %v2132 = vadd.f32 %v2096, %v2125
        %v2133 = vadd.f32 %v2097, %v2125
        %v2134 = vadd.f32 %v2098, %v2125
        %v2135 = vadd.f32 %v2099, %v2125
        %v2136 = vadd.f32 %v2100, %v2125
        %v2137 = vadd.f32 %v2101, %v2125
        %v2138 = vadd.f32 %v2102, %v2125
        %v2139 = vadd.f32 %v2103, %v2125
        %v2140 = vadd.f32 %v2104, %v2125
        %v2141 = vadd.f32 %v2105, %v2125
        %v2142 = vadd.f32 %v2106, %v2125
        %v2143 = vadd.f32 %v2107, %v2125
        %v2144 = vadd.f32 %v2108, %v2125
        %v2145 = vadd.f32 %v2109, %v2125
        %v2146 = vadd.f32 %v2110, %v2125
        %v2147 = vadd.f32 %v2111, %v2125
        %v2148 = vadd.f32 %v2112, %v2125
        %v2149 = vadd.f32 %v2113, %v2125
        %v2150 = vadd.f32 %v2114, %v2125
        %v2151 = vadd.f32 %v2115, %v2125
        %v2152 = vadd.f32 %v2116, %v2125
        %v2153 = vadd.f32 %v2117, %v2125
        %v2154 = vadd.f32 %v2118, %v2125
        %v2155 = vadd.f32 %v2119, %v2125
        %v2156 = vadd.f32 %v2120, %v2125
        %v2157 = vadd.f32 %v2121, %v2125
        %v2158 = vmax.f32 %v2126, 0.0
        %v2159 = vmax.f32 %v2127, 0.0
        %v2160 = vmax.f32 %v2128, 0.0
        %v2161 = vmax.f32 %v2129, 0.0
        %v2162 = vmax.f32 %v2130, 0.0
        %v2163 = vmax.f32 %v2131, 0.0
        %v2164 = vmax.f32 %v2132, 0.0
        %v2165 = vmax.f32 %v2133, 0.0
        %v2166 = vmax.f32 %v2134, 0.0
        %v2167 = vmax.f32 %v2135, 0.0
        %v2168 = vmax.f32 %v2136, 0.0
        %v2169 = vmax.f32 %v2137, 0.0
        %v2170 = vmax.f32 %v2138, 0.0
        %v2171 = vmax.f32 %v2139, 0.0
        %v2172 = vmax.f32 %v2140, 0.0
        %v2173 = vmax.f32 %v2141, 0.0
        %v2174 = vmax.f32 %v2142, 0.0
        %v2175 = vmax.f32 %v2143, 0.0
        %v2176 = vmax.f32 %v2144, 0.0
        %v2177 = vmax.f32 %v2145, 0.0
        %v2178 = vmax.f32 %v2146, 0.0
        %v2179 = vmax.f32 %v2147, 0.0
        %v2180 = vmax.f32 %v2148, 0.0
        %v2181 = vmax.f32 %v2149, 0.0
        %v2182 = vmax.f32 %v2150, 0.0
        %v2183 = vmax.f32 %v2151, 0.0
        %v2184 = vmax.f32 %v2152, 0.0
        %v2185 = vmax.f32 %v2153, 0.0
        %v2186 = vmax.f32 %v2154, 0.0
        %v2187 = vmax.f32 %v2155, 0.0
        %v2188 = vmax.f32 %v2156, 0.0
        %v2189 = vmax.f32 %v2157, 0.0
        %2190 = vst [vmem:[%s245] sm:$0xff] %v2158
        %2191 = vst [vmem:[%s245 + $0x8] sm:$0xff] %v2159
        %2192 = vst [vmem:[%s245 + $0x10] sm:$0xff] %v2160
        %2193 = vst [vmem:[%s245 + $0x18] sm:$0xff] %v2161
        %2194 = vst [vmem:[%s245 + $0x20] sm:$0xff] %v2162
        %2195 = vst [vmem:[%s245 + $0x28] sm:$0xff] %v2163
        %2196 = vst [vmem:[%s245 + $0x30] sm:$0xff] %v2164
        %2197 = vst [vmem:[%s245 + $0x38] sm:$0xff] %v2165
        %2198 = vst [vmem:[%s245 + $0x40] sm:$0xff] %v2166
        %2199 = vst [vmem:[%s245 + $0x48] sm:$0xff] %v2167
        %2200 = vst [vmem:[%s245 + $0x50] sm:$0xff] %v2168
        %2201 = vst [vmem:[%s245 + $0x58] sm:$0xff] %v2169
        %2202 = vst [vmem:[%s245 + $0x60] sm:$0xff] %v2170
        %2203 = vst [vmem:[%s245 + $0x68] sm:$0xff] %v2171
        %2204 = vst [vmem:[%s245 + $0x70] sm:$0xff] %v2172
        %2205 = vst [vmem:[%s245 + $0x78] sm:$0xff] %v2173
        %2206 = vst [vmem:[%s245 + $0x80] sm:$0xff] %v2174
        %2207 = vst [vmem:[%s245 + $0x88] sm:$0xff] %v2175
        %2208 = vst [vmem:[%s245 + $0x90] sm:$0xff] %v2176
        %2209 = vst [vmem:[%s245 + $0x98] sm:$0xff] %v2177
        %2210 = vst [vmem:[%s245 + $0xa0] sm:$0xff] %v2178
        %2211 = vst [vmem:[%s245 + $0xa8] sm:$0xff] %v2179
        %2212 = vst [vmem:[%s245 + $0xb0] sm:$0xff] %v2180
        %2213 = vst [vmem:[%s245 + $0xb8] sm:$0xff] %v2181
        %2214 = vst [vmem:[%s245 + $0xc0] sm:$0xff] %v2182
        %2215 = vst [vmem:[%s245 + $0xc8] sm:$0xff] %v2183
        %2216 = vst [vmem:[%s245 + $0xd0] sm:$0xff] %v2184
        %2217 = vst [vmem:[%s245 + $0xd8] sm:$0xff] %v2185
        %2218 = vst [vmem:[%s245 + $0xe0] sm:$0xff] %v2186
        %2219 = vst [vmem:[%s245 + $0xe8] sm:$0xff] %v2187
        %2220 = vst [vmem:[%s245 + $0xf0] sm:$0xff] %v2188
        %2221 = vst [vmem:[%s245 + $0xf8] sm:$0xff] %v2189
        %s2222 = sand.u32 %s159, 1
        %s2223 = scalar_lea.sflag [#allocation3], %s2222
        %s2224 = sand.u32 %s159, 1
        %s2225 = smul.addr %s2224, 256
        %s2226 = scalar_lea.vmem [#allocation2], %s2225
        // Predicated region
        $region45: #{tpu_custom_call.1} parent=43 // pred_check
          %p2227 = pneg %p169
        $region46: #{tpu_custom_call.1} parent=43 // pred_check_branch
          %2229 = sbr.rel (%p2227) target = $region48
        $region47: #{tpu_custom_call.1} parent=43 // pred_region
          %s2230 = smul.u32 32, %s20
          %s2232 = ssub.s32 4096, 4096
          %2233 = vsyncadd %s2223, %s2232
          %s2234 = smul.addr %s2230, 128
          %s2235 = scalar_lea.hbm %s6, %s2234
          %s2236 = sshll.u32 %s2226, 4
          %s2237 = int_to_ptr.vmem [resolvable:$true] %s2236
          %2242 = dma.vmem_to_hbm [thread:$0]  %s2237, 4096, %s2235, %s2223, 128, 128, 8
        $region48: #{tpu_custom_call.1} parent=43 // pred_fallthru
          _
      $region44: #{tpu_custom_call.1} parent=5 // pred_fallthru
        _
      %p2243 = scmp.le.s32.totalorder 2, %s15
      // Predicated region
      $region49: #{tpu_custom_call.1} parent=5 // pred_check
        %p2244 = pneg %p2243
      $region50: #{tpu_custom_call.1} parent=5 // pred_check_branch
        %2246 = sbr.rel (%p2244) target = $region52
      $region51: #{tpu_custom_call.1} parent=5 // pred_region
        %s2247 = ssub.s32 %s15, 2
        // Predicated region
        $region53: #{tpu_custom_call.1} parent=51 // pred_check
          %p2248 = pneg %p175
        $region54: #{tpu_custom_call.1} parent=51 // pred_check_branch
          %2250 = sbr.rel (%p2248) target = $region56
        $region55: #{tpu_custom_call.1} parent=51 // pred_region
          %s2251 = sand.u32 %s160, 1
          %s2252 = scalar_lea.sflag [#allocation3], %s2251
          %s2253 = sand.u32 %s160, 1
          %s2254 = smul.addr %s2253, 256
          %s2255 = scalar_lea.vmem [#allocation2], %s2254
          %2256 = dma.done %s2252, 4096
        $region56: #{tpu_custom_call.1} parent=51 // pred_fallthru
          _
      $region52: #{tpu_custom_call.1} parent=5 // pred_fallthru
        _
    $region6: #{tpu_custom_call.1} parent=1 // loop_footer
      %s19 = sadd.s32 1, %s15
    $region7: #{tpu_custom_call.1} parent=1 // loop_footer_branch
      %14 = sbr.rel target = $region3
    $region8: #{tpu_custom_call.1} parent=1 // loop_exit
      _
    %2257 = vsyncpa [#allocation3], 1
    %s2258 = scalar_lea.sflag [#allocation3], 1
    %2259 = vsyncpa %s2258, 1

</llo_original>
